<compile_context>
chip_gen: v7x
topology: tpu7x:2x2x1
jax: 0.10.0
libtpu: 0.0.40
codegen_flags: <defaults>
</compile_context>

<pallas_src>
import functools
import math

import jax
import jax.numpy as jnp
from jax import lax
from jax.experimental import pallas as pl
from jax.experimental.pallas import tpu as pltpu

LN_EPS = 1e-12           # config.layer_norm_eps
GATHER_UNROLL = 8        # DMA descriptors issued per scf.for iteration
NBUF = 3                 # gather pipeline depth (slots)


class BertConfig:
    def __init__(self, vocab_size=30522, hidden_size=768, num_hidden_layers=12,
                 num_attention_heads=12, intermediate_size=3072,
                 max_position_embeddings=512, type_vocab_size=2,
                 layer_norm_eps=1e-12):
        self.vocab_size = vocab_size
        self.hidden_size = hidden_size
        self.num_hidden_layers = num_hidden_layers
        self.num_attention_heads = num_attention_heads
        self.intermediate_size = intermediate_size
        self.max_position_embeddings = max_position_embeddings
        self.type_vocab_size = type_vocab_size
        self.layer_norm_eps = layer_norm_eps


def _gelu(x):
    # tanh approximation of GELU (see TODO above).
    c = math.sqrt(2.0 / math.pi)
    return 0.5 * x * (1.0 + jnp.tanh(c * (x + 0.044715 * x * x * x)))


# --------------------------------------------------------------------------
# BertEmbeddings kernel: word-row gather (manual DMA) + pos + type + LayerNorm
# --------------------------------------------------------------------------
def _bert_embeddings_kernel(ids_ref,               # scalar prefetch: (n_tok,) int32 in SMEM
                            tt_ref,                # (T, 1) int32 token-type ids for this block
                            pos_ref,               # (S, H) position table, VMEM resident
                            type_ref,              # (V, H) token-type table, VMEM resident
                            gamma_ref, beta_ref,   # (1, H) LayerNorm params, VMEM resident
                            word_hbm,              # (vocab, H) word table in HBM (pl.ANY)
                            o_ref,                 # (T, H) output block
                            wbuf, sem,             # (NBUF, T, H) gather slab + NBUF DMA sems
                            *, blocks_per_seq, n_blocks):
    T = o_ref.shape[0]
    step = pl.program_id(0)
    slot = lax.rem(step, NBUF)

    def start_gather(block, s):
        base = block * T

        @pl.loop(0, T // GATHER_UNROLL)
        def _(c):
            r0 = c * GATHER_UNROLL
            for u in range(GATHER_UNROLL):          # partial unroll: keep the
                r = r0 + u                          # misc (DMA-issue) slot fed
                pltpu.make_async_copy(word_hbm.at[ids_ref[base + r]],
                                      wbuf.at[s, r], sem.at[s]).start()

    def wait_gather(s):
        # One aggregated wait sized exactly T*H*dtype bytes: all T row copies
        # signal the same per-slot semaphore, so a single (T, H)-sized
        # descriptor drains them (no T serialized scalar waits).
        pltpu.make_async_copy(word_hbm.at[pl.ds(0, T)], wbuf.at[s],
                              sem.at[s]).wait()

    # Prime the 3-deep pipeline on the first step.
    @pl.when(step == 0)
    def _():
        start_gather(0, 0)
        if n_blocks > 1:
            start_gather(1, 1)

    # Keep block step + (NBUF-1) in flight while computing this block.
    nxt = step + (NBUF - 1)

    @pl.when(nxt < n_blocks)
    def _():
        start_gather(nxt, lax.rem(nxt, NBUF))

    wait_gather(slot)

    # words + positions (positions sliced from the VMEM-resident table).
    pos_start = pl.multiple_of(lax.rem(step, blocks_per_seq) * T, 8)
    x = wbuf[slot].astype(jnp.float32) + \
        pos_ref[pl.ds(pos_start, T), :].astype(jnp.float32)

    # token-type embedding (V == 2 -> single interpolation pass).
    type_table = type_ref[...].astype(jnp.float32)       # (V, H), tiny
    V = type_table.shape[0]
    if V == 2:
        t0 = type_table[0][None, :]
        dt = (type_table[1] - type_table[0])[None, :]
        x = x + t0 + tt_ref[...].astype(jnp.float32) * dt
    else:
        tt = tt_ref[...]
        for v in range(V):
            x = x + jnp.where(tt == v, type_table[v][None, :], 0.0)

    # LayerNorm, single-pass stats (var = E[x^2] - mean^2, f32, BERT scale).
    mean = jnp.mean(x, axis=-1, keepdims=True)
    msq = jnp.mean(x * x, axis=-1, keepdims=True)
    inv = lax.rsqrt(msq - mean * mean + LN_EPS)
    y = (x - mean) * (inv * gamma_ref[...]) + beta_ref[...]
    o_ref[...] = y.astype(o_ref.dtype)


def _pick_token_block(seq_len, target):
    """Largest T <= target with T % 8 == 0 and seq_len % T == 0."""
    t = min(target, seq_len)
    t -= t % 8
    while t >= 8 and seq_len % t != 0:
        t -= 8
    if t < 8:
        raise ValueError(f"seq_len={seq_len} has no multiple-of-8 divisor <= {target}")
    return t


def bert_embeddings(input_ids, token_type_ids, word_emb, pos_emb, type_emb,
                    gamma, beta, *, block_tokens=512, out_dtype=jnp.float32):
    B, S = input_ids.shape
    V, H = type_emb.shape
    n_tok = B * S

    T = _pick_token_block(S, block_tokens)
    blocks_per_seq = S // T
    n_blocks = n_tok // T

    flat_ids = input_ids.reshape(n_tok).astype(jnp.int32)       # SMEM (scalar prefetch)
    tt2 = token_type_ids.reshape(n_tok, 1).astype(jnp.int32)
    pos_used = pos_emb[:S]                                       # only rows actually used
    gamma2 = gamma.reshape(1, H).astype(jnp.float32)
    beta2 = beta.reshape(1, H).astype(jnp.float32)

    kernel = functools.partial(_bert_embeddings_kernel,
                               blocks_per_seq=blocks_per_seq, n_blocks=n_blocks)

    grid_spec = pltpu.PrefetchScalarGridSpec(
        num_scalar_prefetch=1,
        grid=(n_blocks,),
        in_specs=[
            pl.BlockSpec((T, 1), lambda i, ids: (i, 0)),     # token-type ids block
            pl.BlockSpec((S, H), lambda i, ids: (0, 0)),     # pos table, VMEM resident
            pl.BlockSpec((V, H), lambda i, ids: (0, 0)),     # type table, VMEM resident
            pl.BlockSpec((1, H), lambda i, ids: (0, 0)),     # gamma
            pl.BlockSpec((1, H), lambda i, ids: (0, 0)),     # beta
            pl.BlockSpec(memory_space=pl.ANY),               # word table stays in HBM
        ],
        out_specs=pl.BlockSpec((T, H), lambda i, ids: (i, 0)),
        scratch_shapes=[
            pltpu.VMEM((NBUF, T, H), word_emb.dtype),        # 3-deep gather slab
            pltpu.SemaphoreType.DMA((NBUF,)),                # one DMA sem per slot
        ],
    )

    out_flat = pl.pallas_call(
        kernel,
        grid_spec=grid_spec,
        out_shape=jax.ShapeDtypeStruct((n_tok, H), out_dtype),
        # cross-step double/triple-buffer state => token-block axis runs in order.
        compiler_params=pltpu.CompilerParams(dimension_semantics=("arbitrary",)),
    )(flat_ids, tt2, pos_used, type_emb, gamma2, beta2, word_emb)

    return out_flat.reshape(B, S, H)


# --------------------------------------------------------------------------
# Dense (nn.Linear) kernel: tiled matmul + bias + optional activation
# --------------------------------------------------------------------------
def _dense_kernel(x_ref, w_ref, b_ref, o_ref, acc_ref, *, act):
    k = pl.program_id(2)

    @pl.when(k == 0)
    def _():
        acc_ref[...] = jnp.zeros_like(acc_ref)

    acc_ref[...] += jnp.dot(x_ref[...], w_ref[...],
                            preferred_element_type=jnp.float32)

    @pl.when(k == pl.num_programs(2) - 1)
    def _():
        y = acc_ref[...] + b_ref[...].astype(jnp.float32)
        if act == "gelu":
            y = _gelu(y)
        elif act == "tanh":
            y = jnp.tanh(y)
        o_ref[...] = y.astype(o_ref.dtype)


def _tile(dim, target, align):
    if dim <= target:
        return dim
    t = target - (target % align)
    while t >= align and dim % t != 0:
        t -= align
    return dim if t < align else t


def dense(x, w, b, *, act=None, out_dtype=None):
    M, K = x.shape
    K2, N = w.shape
    assert K == K2
    tm = _tile(M, 256, 8)
    tn = _tile(N, 512, 128)
    tk = _tile(K, 512, 128)
    grid = (M // tm, N // tn, K // tk)
    b2 = b.reshape(1, N)

    return pl.pallas_call(
        functools.partial(_dense_kernel, act=act),
        grid=grid,
        in_specs=[pl.BlockSpec((tm, tk), lambda i, j, k: (i, k)),
                  pl.BlockSpec((tk, tn), lambda i, j, k: (k, j)),
                  pl.BlockSpec((1, tn), lambda i, j, k: (0, j))],
        out_specs=pl.BlockSpec((tm, tn), lambda i, j, k: (i, j)),
        scratch_shapes=[pltpu.VMEM((tm, tn), jnp.float32)],
        out_shape=jax.ShapeDtypeStruct((M, N), out_dtype or x.dtype),
        compiler_params=pltpu.CompilerParams(
            dimension_semantics=("parallel", "parallel", "arbitrary")),
    )(x, w, b2)


# --------------------------------------------------------------------------
# Self-attention kernel: per-(batch, head) softmax(QK^T*scale + mask) @ V
# --------------------------------------------------------------------------
def _attention_kernel(q_ref, k_ref, v_ref, m_ref, o_ref, *, scale):
    q = q_ref[0, 0].astype(jnp.float32)        # (S, dH)
    k = k_ref[0, 0].astype(jnp.float32)
    v = v_ref[0, 0].astype(jnp.float32)

    # scores = q @ k^T * scale + additive mask (broadcast over query rows)
    s = lax.dot_general(q, k, (((1,), (1,)), ((), ())),
                        preferred_element_type=jnp.float32) * scale
    s = s + m_ref[0]                            # (S, S) + (1, S)

    s_max = jnp.max(s, axis=-1, keepdims=True)
    p = jnp.exp(s - s_max)
    p = p / jnp.sum(p, axis=-1, keepdims=True)
    # TODO(synk): attention-probs dropout (p=0.1) is identity in eval mode.

    ctx = jnp.dot(p, v, preferred_element_type=jnp.float32)
    o_ref[0, 0] = ctx.astype(o_ref.dtype)


def attention(q, k, v, add_mask, *, scale):
    # q, k, v: (B, nH, S, dH);  add_mask: (B, S) additive (0 / -10000)
    B, nH, S, dH = q.shape
    m3 = add_mask.reshape(B, 1, S).astype(jnp.float32)

    qkv_spec = pl.BlockSpec((1, 1, S, dH), lambda b, h: (b, h, 0, 0))
    return pl.pallas_call(
        functools.partial(_attention_kernel, scale=scale),
        grid=(B, nH),
        in_specs=[qkv_spec, qkv_spec, qkv_spec,
                  pl.BlockSpec((1, 1, S), lambda b, h: (b, 0, 0))],
        out_specs=pl.BlockSpec((1, 1, S, dH), lambda b, h: (b, h, 0, 0)),
        out_shape=jax.ShapeDtypeStruct((B, nH, S, dH), q.dtype),
        compiler_params=pltpu.CompilerParams(
            dimension_semantics=("parallel", "parallel")),
    )(q, k, v, m3)


# --------------------------------------------------------------------------
# Residual add + LayerNorm kernel (BertSelfOutput / BertOutput)
# --------------------------------------------------------------------------
def _add_layernorm_kernel(x_ref, r_ref, g_ref, b_ref, o_ref):
    x = x_ref[...].astype(jnp.float32) + r_ref[...].astype(jnp.float32)
    mean = jnp.mean(x, axis=-1, keepdims=True)
    msq = jnp.mean(x * x, axis=-1, keepdims=True)
    inv = lax.rsqrt(msq - mean * mean + LN_EPS)
    o_ref[...] = ((x - mean) * (inv * g_ref[...]) + b_ref[...]).astype(o_ref.dtype)


def add_layernorm(x, residual, gamma, beta):
    M, H = x.shape
    tm = _tile(M, 512, 8)
    g2 = gamma.reshape(1, H).astype(jnp.float32)
    b2 = beta.reshape(1, H).astype(jnp.float32)
    return pl.pallas_call(
        _add_layernorm_kernel,
        grid=(M // tm,),
        in_specs=[pl.BlockSpec((tm, H), lambda i: (i, 0)),
                  pl.BlockSpec((tm, H), lambda i: (i, 0)),
                  pl.BlockSpec((1, H), lambda i: (0, 0)),
                  pl.BlockSpec((1, H), lambda i: (0, 0))],
        out_specs=pl.BlockSpec((tm, H), lambda i: (i, 0)),
        out_shape=jax.ShapeDtypeStruct((M, H), x.dtype),
        compiler_params=pltpu.CompilerParams(dimension_semantics=("parallel",)),
    )(x, residual, g2, b2)


# --------------------------------------------------------------------------
# Full BertModel forward (Pallas kernels + thin JAX glue between them)
# --------------------------------------------------------------------------
def bert_model(input_ids, token_type_ids, attention_mask, params, cfg,
               *, emb_block_tokens=512):
    B, S = input_ids.shape
    H = cfg.hidden_size
    nH = cfg.num_attention_heads
    dH = H // nH

    if token_type_ids is None:
        token_type_ids = jnp.zeros_like(input_ids)
    if attention_mask is None:
        attention_mask = jnp.ones_like(input_ids)
    add_mask = (1.0 - attention_mask.astype(jnp.float32)) * -10000.0   # (B, S)

    e = params["embeddings"]
    h = bert_embeddings(input_ids, token_type_ids, e["word"], e["pos"], e["type"],
                        e["ln_g"], e["ln_b"], block_tokens=emb_block_tokens)

    x = h.reshape(B * S, H)
    scale = 1.0 / math.sqrt(dH)

    def split_heads(t):
        return t.reshape(B, S, nH, dH).transpose(0, 2, 1, 3)

    for lp in params["layers"]:
        q = dense(x, lp["q_w"], lp["q_b"])
        k = dense(x, lp["k_w"], lp["k_b"])
        v = dense(x, lp["v_w"], lp["v_b"])
        ctx = attention(split_heads(q), split_heads(k), split_heads(v),
                        add_mask, scale=scale)
        ctx = ctx.transpose(0, 2, 1, 3).reshape(B * S, H)
        attn = dense(ctx, lp["ao_w"], lp["ao_b"])
        attn = add_layernorm(attn, x, lp["ao_ln_g"], lp["ao_ln_b"])
        inter = dense(attn, lp["i_w"], lp["i_b"], act="gelu")
        out = dense(inter, lp["o_w"], lp["o_b"])
        x = add_layernorm(out, attn, lp["o_ln_g"], lp["o_ln_b"])

    encoder_out = x.reshape(B, S, H)
    first = encoder_out[:, 0, :]                               # (B, H)
    pooled = dense(first, params["pooler"]["w"], params["pooler"]["b"], act="tanh")
    return encoder_out, pooled


# --------------------------------------------------------------------------
# Pure-JAX reference (mirrors the PyTorch forward, eval mode, same gelu)
# --------------------------------------------------------------------------
def bert_model_ref(input_ids, token_type_ids, attention_mask, params, cfg):
    B, S = input_ids.shape
    H = cfg.hidden_size
    nH = cfg.num_attention_heads
    dH = H // nH
    if token_type_ids is None:
        token_type_ids = jnp.zeros_like(input_ids)
    if attention_mask is None:
        attention_mask = jnp.ones_like(input_ids)
    add_mask = (1.0 - attention_mask.astype(jnp.float32)) * -10000.0

    def ln(x, g, b):
        mean = x.mean(-1, keepdims=True)
        var = ((x - mean) ** 2).mean(-1, keepdims=True)
        return (x - mean) * lax.rsqrt(var + LN_EPS) * g + b

    e = params["embeddings"]
    pos_ids = jnp.arange(S)
    h = e["word"][input_ids] + e["pos"][pos_ids][None, :, :] + e["type"][token_type_ids]
    h = ln(h, e["ln_g"], e["ln_b"])

    for lp in params["layers"]:
        q = h @ lp["q_w"] + lp["q_b"]
        k = h @ lp["k_w"] + lp["k_b"]
        v = h @ lp["v_w"] + lp["v_b"]

        def split(t):
            return t.reshape(B, S, nH, dH).transpose(0, 2, 1, 3)

        s = jnp.einsum("bhqd,bhkd->bhqk", split(q), split(k)) / math.sqrt(dH)
        s = s + add_mask[:, None, None, :]
        p = jax.nn.softmax(s, axis=-1)
        ctx = jnp.einsum("bhqk,bhkd->bhqd", p, split(v))
        ctx = ctx.transpose(0, 2, 1, 3).reshape(B, S, H)

        attn = ln(ctx @ lp["ao_w"] + lp["ao_b"] + h, lp["ao_ln_g"], lp["ao_ln_b"])
        inter = _gelu(attn @ lp["i_w"] + lp["i_b"])
        h = ln(inter @ lp["o_w"] + lp["o_b"] + attn, lp["o_ln_g"], lp["o_ln_b"])

    first = h[:, 0, :]
    pooled = jnp.tanh(first @ params["pooler"]["w"] + params["pooler"]["b"])
    return h, pooled


# --------------------------------------------------------------------------
# Parameter init + self-check
# --------------------------------------------------------------------------
def init_bert_params(key, cfg):
    H, I = cfg.hidden_size, cfg.intermediate_size

    def nrm(k, shape, s=0.02):
        return jax.random.normal(k, shape, jnp.float32) * s

    keys = iter(jax.random.split(key, 16 + 20 * cfg.num_hidden_layers))
    emb = dict(
        word=nrm(next(keys), (cfg.vocab_size, H)),
        pos=nrm(next(keys), (cfg.max_position_embeddings, H)),
        type=nrm(next(keys), (cfg.type_vocab_size, H)),
        ln_g=1.0 + nrm(next(keys), (H,)),
        ln_b=nrm(next(keys), (H,)),
    )
    layers = []
    for _ in range(cfg.num_hidden_layers):
        layers.append(dict(
            q_w=nrm(next(keys), (H, H)), q_b=nrm(next(keys), (H,)),
            k_w=nrm(next(keys), (H, H)), k_b=nrm(next(keys), (H,)),
            v_w=nrm(next(keys), (H, H)), v_b=nrm(next(keys), (H,)),
            ao_w=nrm(next(keys), (H, H)), ao_b=nrm(next(keys), (H,)),
            ao_ln_g=1.0 + nrm(next(keys), (H,)), ao_ln_b=nrm(next(keys), (H,)),
            i_w=nrm(next(keys), (H, I)), i_b=nrm(next(keys), (I,)),
            o_w=nrm(next(keys), (I, H)), o_b=nrm(next(keys), (H,)),
            o_ln_g=1.0 + nrm(next(keys), (H,)), o_ln_b=nrm(next(keys), (H,)),
        ))
    pooler = dict(w=nrm(next(keys), (H, H)), b=nrm(next(keys), (H,)))
    return dict(embeddings=emb, layers=layers, pooler=pooler)


if __name__ == "__main__":
    cfg = BertConfig(vocab_size=512, hidden_size=128, num_hidden_layers=2,
                     num_attention_heads=4, intermediate_size=512,
                     max_position_embeddings=64, type_vocab_size=2)
    B, S = 2, 16

    key = jax.random.PRNGKey(0)
    k_params, k_ids, k_tt = jax.random.split(key, 3)
    params = init_bert_params(k_params, cfg)

    input_ids = jax.random.randint(k_ids, (B, S), 0, cfg.vocab_size, dtype=jnp.int32)
    token_type_ids = jax.random.randint(k_tt, (B, S), 0, cfg.type_vocab_size, dtype=jnp.int32)
    attention_mask = jnp.ones((B, S), jnp.int32).at[1, -3:].set(0)   # some masked keys

    # emb_block_tokens=8 -> 4 token blocks, 2 position blocks per sequence:
    # exercises the 3-deep gather pipeline, slot wrap and in-kernel pos slicing.
    enc, pooled = bert_model(input_ids, token_type_ids, attention_mask, params, cfg,
                             emb_block_tokens=8)
    enc = jax.block_until_ready(enc)
    pooled = jax.block_until_ready(pooled)

    ref_enc, ref_pooled = bert_model_ref(input_ids, token_type_ids, attention_mask,
                                         params, cfg)

    assert enc.shape == (B, S, cfg.hidden_size)
    assert pooled.shape == (B, cfg.hidden_size)
    assert jnp.allclose(enc, ref_enc, atol=1e-3, rtol=1e-3), \
        "encoder output mismatch vs. JAX reference"
    assert jnp.allclose(pooled, ref_pooled, atol=1e-3, rtol=1e-3), \
        "pooled output mismatch vs. JAX reference"

    print("KERNEL_OK")
</pallas_src>

<mosaic_0001>
module attributes {stable_mosaic.version = 11 : i64} {
  func.func @_bert_embeddings_kernel(%arg0: i32, %arg1: memref<32xi32, #tpu.memory_space<smem>>, %arg2: memref<8x1xi32, #tpu.memory_space<vmem>>, %arg3: memref<16x128xf32, #tpu.memory_space<vmem>>, %arg4: memref<2x128xf32, #tpu.memory_space<vmem>>, %arg5: memref<1x128xf32, #tpu.memory_space<vmem>>, %arg6: memref<1x128xf32, #tpu.memory_space<vmem>>, %arg7: memref<512x128xf32, #tpu.memory_space<any>>, %arg8: memref<8x128xf32, #tpu.memory_space<vmem>>, %arg9: memref<3x8x128xf32, #tpu.memory_space<vmem>>, %arg10: memref<3x!tpu.dma_semaphore, #tpu.memory_space<semaphore_mem>>) attributes {dimension_semantics = [#tpu.dimension_semantics<arbitrary>], iteration_bounds = array<i64: 4>, scalar_prefetch = 1 : i64, scratch_operands = 2 : i64, tpu.core_type = #tpu.core_type<tc>, window_params = [{transform_indices = @transform_0, window_bounds = array<i64: 8, 1>}, {pipeline_mode = #tpu.pipeline_mode<synchronous>, transform_indices = @transform_1, window_bounds = array<i64: 16, 128>}, {pipeline_mode = #tpu.pipeline_mode<synchronous>, transform_indices = @transform_2, window_bounds = array<i64: 2, 128>}, {pipeline_mode = #tpu.pipeline_mode<synchronous>, transform_indices = @transform_3, window_bounds = array<i64: 1, 128>}, {pipeline_mode = #tpu.pipeline_mode<synchronous>, transform_indices = @transform_4, window_bounds = array<i64: 1, 128>}, {}, {transform_indices = @transform_6, window_bounds = array<i64: 8, 128>}]} {
    %c3_i32 = arith.constant 3 : i32
    %0 = arith.remsi %arg0, %c3_i32 : i32
    %c0_i32 = arith.constant 0 : i32
    %1 = arith.cmpi eq, %arg0, %c0_i32 : i32
    %2 = arith.extui %1 : i1 to i32
    %c0_i32_0 = arith.constant 0 : i32
    %3 = arith.cmpi ne, %2, %c0_i32_0 : i32
    scf.if %3 {
      %c0_i32_23 = arith.constant 0 : i32
      %c1_i32 = arith.constant 1 : i32
      %65 = arith.muli %c0_i32_23, %c1_i32 : i32
      %c0_i32_24 = arith.constant 0 : i32
      %66 = arith.addi %c0_i32_24, %65 : i32
      %c8_i32_25 = arith.constant 8 : i32
      %67 = arith.muli %66, %c8_i32_25 : i32
      %c0_i32_26 = arith.constant 0 : i32
      %68 = arith.addi %67, %c0_i32_26 : i32
      %c0_i32_27 = arith.constant 0 : i32
      %69 = arith.addi %c0_i32_27, %68 : i32
      %70 = arith.index_cast %69 : i32 to index
      %71 = memref.load %arg1[%70] : memref<32xi32, #tpu.memory_space<smem>>
      %c0_i32_28 = arith.constant 0 : i32
      %c0_i32_29 = arith.constant 0 : i32
      %c0_i32_30 = arith.constant 0 : i32
      %72 = tpu.memref_slice %arg7[%71, %c0_i32_30] : memref<512x128xf32, #tpu.memory_space<any>> -> memref<1x128xf32, #tpu.memory_space<any>>
      %73 = tpu.memref_squeeze %72 : memref<1x128xf32, #tpu.memory_space<any>> -> memref<128xf32, #tpu.memory_space<any>>
      %c0_i32_31 = arith.constant 0 : i32
      %74 = tpu.memref_slice %arg9[%c0_i32_28, %68, %c0_i32_31] : memref<3x8x128xf32, #tpu.memory_space<vmem>> -> memref<1x1x128xf32, #tpu.memory_space<vmem>>
      %75 = tpu.memref_squeeze %74 : memref<1x1x128xf32, #tpu.memory_space<vmem>> -> memref<128xf32, #tpu.memory_space<vmem>>
      %76 = tpu.memref_slice %arg10[%c0_i32_29] : memref<3x!tpu.dma_semaphore, #tpu.memory_space<semaphore_mem>> -> memref<1x!tpu.dma_semaphore, #tpu.memory_space<semaphore_mem>>
      %77 = tpu.memref_squeeze %76 : memref<1x!tpu.dma_semaphore, #tpu.memory_space<semaphore_mem>> -> memref<!tpu.dma_semaphore, #tpu.memory_space<semaphore_mem>>
      tpu.enqueue_dma source(%73 : memref<128xf32, #tpu.memory_space<any>>) target(%75 : memref<128xf32, #tpu.memory_space<vmem>>) target_semaphore(%77 : memref<!tpu.dma_semaphore, #tpu.memory_space<semaphore_mem>>)
      %c1_i32_32 = arith.constant 1 : i32
      %78 = arith.addi %67, %c1_i32_32 : i32
      %c0_i32_33 = arith.constant 0 : i32
      %79 = arith.addi %c0_i32_33, %78 : i32
      %80 = arith.index_cast %79 : i32 to index
      %81 = memref.load %arg1[%80] : memref<32xi32, #tpu.memory_space<smem>>
      %c0_i32_34 = arith.constant 0 : i32
      %c0_i32_35 = arith.constant 0 : i32
      %c0_i32_36 = arith.constant 0 : i32
      %82 = tpu.memref_slice %arg7[%81, %c0_i32_36] : memref<512x128xf32, #tpu.memory_space<any>> -> memref<1x128xf32, #tpu.memory_space<any>>
      %83 = tpu.memref_squeeze %82 : memref<1x128xf32, #tpu.memory_space<any>> -> memref<128xf32, #tpu.memory_space<any>>
      %c0_i32_37 = arith.constant 0 : i32
      %84 = tpu.memref_slice %arg9[%c0_i32_34, %78, %c0_i32_37] : memref<3x8x128xf32, #tpu.memory_space<vmem>> -> memref<1x1x128xf32, #tpu.memory_space<vmem>>
      %85 = tpu.memref_squeeze %84 : memref<1x1x128xf32, #tpu.memory_space<vmem>> -> memref<128xf32, #tpu.memory_space<vmem>>
      %86 = tpu.memref_slice %arg10[%c0_i32_35] : memref<3x!tpu.dma_semaphore, #tpu.memory_space<semaphore_mem>> -> memref<1x!tpu.dma_semaphore, #tpu.memory_space<semaphore_mem>>
      %87 = tpu.memref_squeeze %86 : memref<1x!tpu.dma_semaphore, #tpu.memory_space<semaphore_mem>> -> memref<!tpu.dma_semaphore, #tpu.memory_space<semaphore_mem>>
      tpu.enqueue_dma source(%83 : memref<128xf32, #tpu.memory_space<any>>) target(%85 : memref<128xf32, #tpu.memory_space<vmem>>) target_semaphore(%87 : memref<!tpu.dma_semaphore, #tpu.memory_space<semaphore_mem>>)
      %c2_i32_38 = arith.constant 2 : i32
      %88 = arith.addi %67, %c2_i32_38 : i32
      %c0_i32_39 = arith.constant 0 : i32
      %89 = arith.addi %c0_i32_39, %88 : i32
      %90 = arith.index_cast %89 : i32 to index
      %91 = memref.load %arg1[%90] : memref<32xi32, #tpu.memory_space<smem>>
      %c0_i32_40 = arith.constant 0 : i32
      %c0_i32_41 = arith.constant 0 : i32
      %c0_i32_42 = arith.constant 0 : i32
      %92 = tpu.memref_slice %arg7[%91, %c0_i32_42] : memref<512x128xf32, #tpu.memory_space<any>> -> memref<1x128xf32, #tpu.memory_space<any>>
      %93 = tpu.memref_squeeze %92 : memref<1x128xf32, #tpu.memory_space<any>> -> memref<128xf32, #tpu.memory_space<any>>
      %c0_i32_43 = arith.constant 0 : i32
      %94 = tpu.memref_slice %arg9[%c0_i32_40, %88, %c0_i32_43] : memref<3x8x128xf32, #tpu.memory_space<vmem>> -> memref<1x1x128xf32, #tpu.memory_space<vmem>>
      %95 = tpu.memref_squeeze %94 : memref<1x1x128xf32, #tpu.memory_space<vmem>> -> memref<128xf32, #tpu.memory_space<vmem>>
      %96 = tpu.memref_slice %arg10[%c0_i32_41] : memref<3x!tpu.dma_semaphore, #tpu.memory_space<semaphore_mem>> -> memref<1x!tpu.dma_semaphore, #tpu.memory_space<semaphore_mem>>
      %97 = tpu.memref_squeeze %96 : memref<1x!tpu.dma_semaphore, #tpu.memory_space<semaphore_mem>> -> memref<!tpu.dma_semaphore, #tpu.memory_space<semaphore_mem>>
      tpu.enqueue_dma source(%93 : memref<128xf32, #tpu.memory_space<any>>) target(%95 : memref<128xf32, #tpu.memory_space<vmem>>) target_semaphore(%97 : memref<!tpu.dma_semaphore, #tpu.memory_space<semaphore_mem>>)
      %c3_i32_44 = arith.constant 3 : i32
      %98 = arith.addi %67, %c3_i32_44 : i32
      %c0_i32_45 = arith.constant 0 : i32
      %99 = arith.addi %c0_i32_45, %98 : i32
      %100 = arith.index_cast %99 : i32 to index
      %101 = memref.load %arg1[%100] : memref<32xi32, #tpu.memory_space<smem>>
      %c0_i32_46 = arith.constant 0 : i32
      %c0_i32_47 = arith.constant 0 : i32
      %c0_i32_48 = arith.constant 0 : i32
      %102 = tpu.memref_slice %arg7[%101, %c0_i32_48] : memref<512x128xf32, #tpu.memory_space<any>> -> memref<1x128xf32, #tpu.memory_space<any>>
      %103 = tpu.memref_squeeze %102 : memref<1x128xf32, #tpu.memory_space<any>> -> memref<128xf32, #tpu.memory_space<any>>
      %c0_i32_49 = arith.constant 0 : i32
      %104 = tpu.memref_slice %arg9[%c0_i32_46, %98, %c0_i32_49] : memref<3x8x128xf32, #tpu.memory_space<vmem>> -> memref<1x1x128xf32, #tpu.memory_space<vmem>>
      %105 = tpu.memref_squeeze %104 : memref<1x1x128xf32, #tpu.memory_space<vmem>> -> memref<128xf32, #tpu.memory_space<vmem>>
      %106 = tpu.memref_slice %arg10[%c0_i32_47] : memref<3x!tpu.dma_semaphore, #tpu.memory_space<semaphore_mem>> -> memref<1x!tpu.dma_semaphore, #tpu.memory_space<semaphore_mem>>
      %107 = tpu.memref_squeeze %106 : memref<1x!tpu.dma_semaphore, #tpu.memory_space<semaphore_mem>> -> memref<!tpu.dma_semaphore, #tpu.memory_space<semaphore_mem>>
      tpu.enqueue_dma source(%103 : memref<128xf32, #tpu.memory_space<any>>) target(%105 : memref<128xf32, #tpu.memory_space<vmem>>) target_semaphore(%107 : memref<!tpu.dma_semaphore, #tpu.memory_space<semaphore_mem>>)
      %c4_i32_50 = arith.constant 4 : i32
      %108 = arith.addi %67, %c4_i32_50 : i32
      %c0_i32_51 = arith.constant 0 : i32
      %109 = arith.addi %c0_i32_51, %108 : i32
      %110 = arith.index_cast %109 : i32 to index
      %111 = memref.load %arg1[%110] : memref<32xi32, #tpu.memory_space<smem>>
      %c0_i32_52 = arith.constant 0 : i32
      %c0_i32_53 = arith.constant 0 : i32
      %c0_i32_54 = arith.constant 0 : i32
      %112 = tpu.memref_slice %arg7[%111, %c0_i32_54] : memref<512x128xf32, #tpu.memory_space<any>> -> memref<1x128xf32, #tpu.memory_space<any>>
      %113 = tpu.memref_squeeze %112 : memref<1x128xf32, #tpu.memory_space<any>> -> memref<128xf32, #tpu.memory_space<any>>
      %c0_i32_55 = arith.constant 0 : i32
      %114 = tpu.memref_slice %arg9[%c0_i32_52, %108, %c0_i32_55] : memref<3x8x128xf32, #tpu.memory_space<vmem>> -> memref<1x1x128xf32, #tpu.memory_space<vmem>>
      %115 = tpu.memref_squeeze %114 : memref<1x1x128xf32, #tpu.memory_space<vmem>> -> memref<128xf32, #tpu.memory_space<vmem>>
      %116 = tpu.memref_slice %arg10[%c0_i32_53] : memref<3x!tpu.dma_semaphore, #tpu.memory_space<semaphore_mem>> -> memref<1x!tpu.dma_semaphore, #tpu.memory_space<semaphore_mem>>
      %117 = tpu.memref_squeeze %116 : memref<1x!tpu.dma_semaphore, #tpu.memory_space<semaphore_mem>> -> memref<!tpu.dma_semaphore, #tpu.memory_space<semaphore_mem>>
      tpu.enqueue_dma source(%113 : memref<128xf32, #tpu.memory_space<any>>) target(%115 : memref<128xf32, #tpu.memory_space<vmem>>) target_semaphore(%117 : memref<!tpu.dma_semaphore, #tpu.memory_space<semaphore_mem>>)
      %c5_i32 = arith.constant 5 : i32
      %118 = arith.addi %67, %c5_i32 : i32
      %c0_i32_56 = arith.constant 0 : i32
      %119 = arith.addi %c0_i32_56, %118 : i32
      %120 = arith.index_cast %119 : i32 to index
      %121 = memref.load %arg1[%120] : memref<32xi32, #tpu.memory_space<smem>>
      %c0_i32_57 = arith.constant 0 : i32
      %c0_i32_58 = arith.constant 0 : i32
      %c0_i32_59 = arith.constant 0 : i32
      %122 = tpu.memref_slice %arg7[%121, %c0_i32_59] : memref<512x128xf32, #tpu.memory_space<any>> -> memref<1x128xf32, #tpu.memory_space<any>>
      %123 = tpu.memref_squeeze %122 : memref<1x128xf32, #tpu.memory_space<any>> -> memref<128xf32, #tpu.memory_space<any>>
      %c0_i32_60 = arith.constant 0 : i32
      %124 = tpu.memref_slice %arg9[%c0_i32_57, %118, %c0_i32_60] : memref<3x8x128xf32, #tpu.memory_space<vmem>> -> memref<1x1x128xf32, #tpu.memory_space<vmem>>
      %125 = tpu.memref_squeeze %124 : memref<1x1x128xf32, #tpu.memory_space<vmem>> -> memref<128xf32, #tpu.memory_space<vmem>>
      %126 = tpu.memref_slice %arg10[%c0_i32_58] : memref<3x!tpu.dma_semaphore, #tpu.memory_space<semaphore_mem>> -> memref<1x!tpu.dma_semaphore, #tpu.memory_space<semaphore_mem>>
      %127 = tpu.memref_squeeze %126 : memref<1x!tpu.dma_semaphore, #tpu.memory_space<semaphore_mem>> -> memref<!tpu.dma_semaphore, #tpu.memory_space<semaphore_mem>>
      tpu.enqueue_dma source(%123 : memref<128xf32, #tpu.memory_space<any>>) target(%125 : memref<128xf32, #tpu.memory_space<vmem>>) target_semaphore(%127 : memref<!tpu.dma_semaphore, #tpu.memory_space<semaphore_mem>>)
      %c6_i32 = arith.constant 6 : i32
      %128 = arith.addi %67, %c6_i32 : i32
      %c0_i32_61 = arith.constant 0 : i32
      %129 = arith.addi %c0_i32_61, %128 : i32
      %130 = arith.index_cast %129 : i32 to index
      %131 = memref.load %arg1[%130] : memref<32xi32, #tpu.memory_space<smem>>
      %c0_i32_62 = arith.constant 0 : i32
      %c0_i32_63 = arith.constant 0 : i32
      %c0_i32_64 = arith.constant 0 : i32
      %132 = tpu.memref_slice %arg7[%131, %c0_i32_64] : memref<512x128xf32, #tpu.memory_space<any>> -> memref<1x128xf32, #tpu.memory_space<any>>
      %133 = tpu.memref_squeeze %132 : memref<1x128xf32, #tpu.memory_space<any>> -> memref<128xf32, #tpu.memory_space<any>>
      %c0_i32_65 = arith.constant 0 : i32
      %134 = tpu.memref_slice %arg9[%c0_i32_62, %128, %c0_i32_65] : memref<3x8x128xf32, #tpu.memory_space<vmem>> -> memref<1x1x128xf32, #tpu.memory_space<vmem>>
      %135 = tpu.memref_squeeze %134 : memref<1x1x128xf32, #tpu.memory_space<vmem>> -> memref<128xf32, #tpu.memory_space<vmem>>
      %136 = tpu.memref_slice %arg10[%c0_i32_63] : memref<3x!tpu.dma_semaphore, #tpu.memory_space<semaphore_mem>> -> memref<1x!tpu.dma_semaphore, #tpu.memory_space<semaphore_mem>>
      %137 = tpu.memref_squeeze %136 : memref<1x!tpu.dma_semaphore, #tpu.memory_space<semaphore_mem>> -> memref<!tpu.dma_semaphore, #tpu.memory_space<semaphore_mem>>
      tpu.enqueue_dma source(%133 : memref<128xf32, #tpu.memory_space<any>>) target(%135 : memref<128xf32, #tpu.memory_space<vmem>>) target_semaphore(%137 : memref<!tpu.dma_semaphore, #tpu.memory_space<semaphore_mem>>)
      %c7_i32 = arith.constant 7 : i32
      %138 = arith.addi %67, %c7_i32 : i32
      %c0_i32_66 = arith.constant 0 : i32
      %139 = arith.addi %c0_i32_66, %138 : i32
      %140 = arith.index_cast %139 : i32 to index
      %141 = memref.load %arg1[%140] : memref<32xi32, #tpu.memory_space<smem>>
      %c0_i32_67 = arith.constant 0 : i32
      %c0_i32_68 = arith.constant 0 : i32
      %c0_i32_69 = arith.constant 0 : i32
      %142 = tpu.memref_slice %arg7[%141, %c0_i32_69] : memref<512x128xf32, #tpu.memory_space<any>> -> memref<1x128xf32, #tpu.memory_space<any>>
      %143 = tpu.memref_squeeze %142 : memref<1x128xf32, #tpu.memory_space<any>> -> memref<128xf32, #tpu.memory_space<any>>
      %c0_i32_70 = arith.constant 0 : i32
      %144 = tpu.memref_slice %arg9[%c0_i32_67, %138, %c0_i32_70] : memref<3x8x128xf32, #tpu.memory_space<vmem>> -> memref<1x1x128xf32, #tpu.memory_space<vmem>>
      %145 = tpu.memref_squeeze %144 : memref<1x1x128xf32, #tpu.memory_space<vmem>> -> memref<128xf32, #tpu.memory_space<vmem>>
      %146 = tpu.memref_slice %arg10[%c0_i32_68] : memref<3x!tpu.dma_semaphore, #tpu.memory_space<semaphore_mem>> -> memref<1x!tpu.dma_semaphore, #tpu.memory_space<semaphore_mem>>
      %147 = tpu.memref_squeeze %146 : memref<1x!tpu.dma_semaphore, #tpu.memory_space<semaphore_mem>> -> memref<!tpu.dma_semaphore, #tpu.memory_space<semaphore_mem>>
      tpu.enqueue_dma source(%143 : memref<128xf32, #tpu.memory_space<any>>) target(%145 : memref<128xf32, #tpu.memory_space<vmem>>) target_semaphore(%147 : memref<!tpu.dma_semaphore, #tpu.memory_space<semaphore_mem>>)
      %c1_i32_71 = arith.constant 1 : i32
      %c0_i32_72 = arith.constant 0 : i32
      %c1_i32_73 = arith.constant 1 : i32
      %148 = arith.muli %c0_i32_72, %c1_i32_73 : i32
      %c0_i32_74 = arith.constant 0 : i32
      %149 = arith.addi %c0_i32_74, %148 : i32
      %c8_i32_75 = arith.constant 8 : i32
      %150 = arith.muli %149, %c8_i32_75 : i32
      %c0_i32_76 = arith.constant 0 : i32
      %151 = arith.addi %150, %c0_i32_76 : i32
      %c8_i32_77 = arith.constant 8 : i32
      %152 = arith.addi %c8_i32_77, %151 : i32
      %153 = arith.index_cast %152 : i32 to index
      %154 = memref.load %arg1[%153] : memref<32xi32, #tpu.memory_space<smem>>
      %c1_i32_78 = arith.constant 1 : i32
      %c1_i32_79 = arith.constant 1 : i32
      %c0_i32_80 = arith.constant 0 : i32
      %155 = tpu.memref_slice %arg7[%154, %c0_i32_80] : memref<512x128xf32, #tpu.memory_space<any>> -> memref<1x128xf32, #tpu.memory_space<any>>
      %156 = tpu.memref_squeeze %155 : memref<1x128xf32, #tpu.memory_space<any>> -> memref<128xf32, #tpu.memory_space<any>>
      %c0_i32_81 = arith.constant 0 : i32
      %157 = tpu.memref_slice %arg9[%c1_i32_78, %151, %c0_i32_81] : memref<3x8x128xf32, #tpu.memory_space<vmem>> -> memref<1x1x128xf32, #tpu.memory_space<vmem>>
      %158 = tpu.memref_squeeze %157 : memref<1x1x128xf32, #tpu.memory_space<vmem>> -> memref<128xf32, #tpu.memory_space<vmem>>
      %159 = tpu.memref_slice %arg10[%c1_i32_79] : memref<3x!tpu.dma_semaphore, #tpu.memory_space<semaphore_mem>> -> memref<1x!tpu.dma_semaphore, #tpu.memory_space<semaphore_mem>>
      %160 = tpu.memref_squeeze %159 : memref<1x!tpu.dma_semaphore, #tpu.memory_space<semaphore_mem>> -> memref<!tpu.dma_semaphore, #tpu.memory_space<semaphore_mem>>
      tpu.enqueue_dma source(%156 : memref<128xf32, #tpu.memory_space<any>>) target(%158 : memref<128xf32, #tpu.memory_space<vmem>>) target_semaphore(%160 : memref<!tpu.dma_semaphore, #tpu.memory_space<semaphore_mem>>)
      %c1_i32_82 = arith.constant 1 : i32
      %161 = arith.addi %150, %c1_i32_82 : i32
      %c8_i32_83 = arith.constant 8 : i32
      %162 = arith.addi %c8_i32_83, %161 : i32
      %163 = arith.index_cast %162 : i32 to index
      %164 = memref.load %arg1[%163] : memref<32xi32, #tpu.memory_space<smem>>
      %c1_i32_84 = arith.constant 1 : i32
      %c1_i32_85 = arith.constant 1 : i32
      %c0_i32_86 = arith.constant 0 : i32
      %165 = tpu.memref_slice %arg7[%164, %c0_i32_86] : memref<512x128xf32, #tpu.memory_space<any>> -> memref<1x128xf32, #tpu.memory_space<any>>
      %166 = tpu.memref_squeeze %165 : memref<1x128xf32, #tpu.memory_space<any>> -> memref<128xf32, #tpu.memory_space<any>>
      %c0_i32_87 = arith.constant 0 : i32
      %167 = tpu.memref_slice %arg9[%c1_i32_84, %161, %c0_i32_87] : memref<3x8x128xf32, #tpu.memory_space<vmem>> -> memref<1x1x128xf32, #tpu.memory_space<vmem>>
      %168 = tpu.memref_squeeze %167 : memref<1x1x128xf32, #tpu.memory_space<vmem>> -> memref<128xf32, #tpu.memory_space<vmem>>
      %169 = tpu.memref_slice %arg10[%c1_i32_85] : memref<3x!tpu.dma_semaphore, #tpu.memory_space<semaphore_mem>> -> memref<1x!tpu.dma_semaphore, #tpu.memory_space<semaphore_mem>>
      %170 = tpu.memref_squeeze %169 : memref<1x!tpu.dma_semaphore, #tpu.memory_space<semaphore_mem>> -> memref<!tpu.dma_semaphore, #tpu.memory_space<semaphore_mem>>
      tpu.enqueue_dma source(%166 : memref<128xf32, #tpu.memory_space<any>>) target(%168 : memref<128xf32, #tpu.memory_space<vmem>>) target_semaphore(%170 : memref<!tpu.dma_semaphore, #tpu.memory_space<semaphore_mem>>)
      %c2_i32_88 = arith.constant 2 : i32
      %171 = arith.addi %150, %c2_i32_88 : i32
      %c8_i32_89 = arith.constant 8 : i32
      %172 = arith.addi %c8_i32_89, %171 : i32
      %173 = arith.index_cast %172 : i32 to index
      %174 = memref.load %arg1[%173] : memref<32xi32, #tpu.memory_space<smem>>
      %c1_i32_90 = arith.constant 1 : i32
      %c1_i32_91 = arith.constant 1 : i32
      %c0_i32_92 = arith.constant 0 : i32
      %175 = tpu.memref_slice %arg7[%174, %c0_i32_92] : memref<512x128xf32, #tpu.memory_space<any>> -> memref<1x128xf32, #tpu.memory_space<any>>
      %176 = tpu.memref_squeeze %175 : memref<1x128xf32, #tpu.memory_space<any>> -> memref<128xf32, #tpu.memory_space<any>>
      %c0_i32_93 = arith.constant 0 : i32
      %177 = tpu.memref_slice %arg9[%c1_i32_90, %171, %c0_i32_93] : memref<3x8x128xf32, #tpu.memory_space<vmem>> -> memref<1x1x128xf32, #tpu.memory_space<vmem>>
      %178 = tpu.memref_squeeze %177 : memref<1x1x128xf32, #tpu.memory_space<vmem>> -> memref<128xf32, #tpu.memory_space<vmem>>
      %179 = tpu.memref_slice %arg10[%c1_i32_91] : memref<3x!tpu.dma_semaphore, #tpu.memory_space<semaphore_mem>> -> memref<1x!tpu.dma_semaphore, #tpu.memory_space<semaphore_mem>>
      %180 = tpu.memref_squeeze %179 : memref<1x!tpu.dma_semaphore, #tpu.memory_space<semaphore_mem>> -> memref<!tpu.dma_semaphore, #tpu.memory_space<semaphore_mem>>
      tpu.enqueue_dma source(%176 : memref<128xf32, #tpu.memory_space<any>>) target(%178 : memref<128xf32, #tpu.memory_space<vmem>>) target_semaphore(%180 : memref<!tpu.dma_semaphore, #tpu.memory_space<semaphore_mem>>)
      %c3_i32_94 = arith.constant 3 : i32
      %181 = arith.addi %150, %c3_i32_94 : i32
      %c8_i32_95 = arith.constant 8 : i32
      %182 = arith.addi %c8_i32_95, %181 : i32
      %183 = arith.index_cast %182 : i32 to index
      %184 = memref.load %arg1[%183] : memref<32xi32, #tpu.memory_space<smem>>
      %c1_i32_96 = arith.constant 1 : i32
      %c1_i32_97 = arith.constant 1 : i32
      %c0_i32_98 = arith.constant 0 : i32
      %185 = tpu.memref_slice %arg7[%184, %c0_i32_98] : memref<512x128xf32, #tpu.memory_space<any>> -> memref<1x128xf32, #tpu.memory_space<any>>
      %186 = tpu.memref_squeeze %185 : memref<1x128xf32, #tpu.memory_space<any>> -> memref<128xf32, #tpu.memory_space<any>>
      %c0_i32_99 = arith.constant 0 : i32
      %187 = tpu.memref_slice %arg9[%c1_i32_96, %181, %c0_i32_99] : memref<3x8x128xf32, #tpu.memory_space<vmem>> -> memref<1x1x128xf32, #tpu.memory_space<vmem>>
      %188 = tpu.memref_squeeze %187 : memref<1x1x128xf32, #tpu.memory_space<vmem>> -> memref<128xf32, #tpu.memory_space<vmem>>
      %189 = tpu.memref_slice %arg10[%c1_i32_97] : memref<3x!tpu.dma_semaphore, #tpu.memory_space<semaphore_mem>> -> memref<1x!tpu.dma_semaphore, #tpu.memory_space<semaphore_mem>>
      %190 = tpu.memref_squeeze %189 : memref<1x!tpu.dma_semaphore, #tpu.memory_space<semaphore_mem>> -> memref<!tpu.dma_semaphore, #tpu.memory_space<semaphore_mem>>
      tpu.enqueue_dma source(%186 : memref<128xf32, #tpu.memory_space<any>>) target(%188 : memref<128xf32, #tpu.memory_space<vmem>>) target_semaphore(%190 : memref<!tpu.dma_semaphore, #tpu.memory_space<semaphore_mem>>)
      %c4_i32_100 = arith.constant 4 : i32
      %191 = arith.addi %150, %c4_i32_100 : i32
      %c8_i32_101 = arith.constant 8 : i32
      %192 = arith.addi %c8_i32_101, %191 : i32
      %193 = arith.index_cast %192 : i32 to index
      %194 = memref.load %arg1[%193] : memref<32xi32, #tpu.memory_space<smem>>
      %c1_i32_102 = arith.constant 1 : i32
      %c1_i32_103 = arith.constant 1 : i32
      %c0_i32_104 = arith.constant 0 : i32
      %195 = tpu.memref_slice %arg7[%194, %c0_i32_104] : memref<512x128xf32, #tpu.memory_space<any>> -> memref<1x128xf32, #tpu.memory_space<any>>
      %196 = tpu.memref_squeeze %195 : memref<1x128xf32, #tpu.memory_space<any>> -> memref<128xf32, #tpu.memory_space<any>>
      %c0_i32_105 = arith.constant 0 : i32
      %197 = tpu.memref_slice %arg9[%c1_i32_102, %191, %c0_i32_105] : memref<3x8x128xf32, #tpu.memory_space<vmem>> -> memref<1x1x128xf32, #tpu.memory_space<vmem>>
      %198 = tpu.memref_squeeze %197 : memref<1x1x128xf32, #tpu.memory_space<vmem>> -> memref<128xf32, #tpu.memory_space<vmem>>
      %199 = tpu.memref_slice %arg10[%c1_i32_103] : memref<3x!tpu.dma_semaphore, #tpu.memory_space<semaphore_mem>> -> memref<1x!tpu.dma_semaphore, #tpu.memory_space<semaphore_mem>>
      %200 = tpu.memref_squeeze %199 : memref<1x!tpu.dma_semaphore, #tpu.memory_space<semaphore_mem>> -> memref<!tpu.dma_semaphore, #tpu.memory_space<semaphore_mem>>
      tpu.enqueue_dma source(%196 : memref<128xf32, #tpu.memory_space<any>>) target(%198 : memref<128xf32, #tpu.memory_space<vmem>>) target_semaphore(%200 : memref<!tpu.dma_semaphore, #tpu.memory_space<semaphore_mem>>)
      %c5_i32_106 = arith.constant 5 : i32
      %201 = arith.addi %150, %c5_i32_106 : i32
      %c8_i32_107 = arith.constant 8 : i32
      %202 = arith.addi %c8_i32_107, %201 : i32
      %203 = arith.index_cast %202 : i32 to index
      %204 = memref.load %arg1[%203] : memref<32xi32, #tpu.memory_space<smem>>
      %c1_i32_108 = arith.constant 1 : i32
      %c1_i32_109 = arith.constant 1 : i32
      %c0_i32_110 = arith.constant 0 : i32
      %205 = tpu.memref_slice %arg7[%204, %c0_i32_110] : memref<512x128xf32, #tpu.memory_space<any>> -> memref<1x128xf32, #tpu.memory_space<any>>
      %206 = tpu.memref_squeeze %205 : memref<1x128xf32, #tpu.memory_space<any>> -> memref<128xf32, #tpu.memory_space<any>>
      %c0_i32_111 = arith.constant 0 : i32
      %207 = tpu.memref_slice %arg9[%c1_i32_108, %201, %c0_i32_111] : memref<3x8x128xf32, #tpu.memory_space<vmem>> -> memref<1x1x128xf32, #tpu.memory_space<vmem>>
      %208 = tpu.memref_squeeze %207 : memref<1x1x128xf32, #tpu.memory_space<vmem>> -> memref<128xf32, #tpu.memory_space<vmem>>
      %209 = tpu.memref_slice %arg10[%c1_i32_109] : memref<3x!tpu.dma_semaphore, #tpu.memory_space<semaphore_mem>> -> memref<1x!tpu.dma_semaphore, #tpu.memory_space<semaphore_mem>>
      %210 = tpu.memref_squeeze %209 : memref<1x!tpu.dma_semaphore, #tpu.memory_space<semaphore_mem>> -> memref<!tpu.dma_semaphore, #tpu.memory_space<semaphore_mem>>
      tpu.enqueue_dma source(%206 : memref<128xf32, #tpu.memory_space<any>>) target(%208 : memref<128xf32, #tpu.memory_space<vmem>>) target_semaphore(%210 : memref<!tpu.dma_semaphore, #tpu.memory_space<semaphore_mem>>)
      %c6_i32_112 = arith.constant 6 : i32
      %211 = arith.addi %150, %c6_i32_112 : i32
      %c8_i32_113 = arith.constant 8 : i32
      %212 = arith.addi %c8_i32_113, %211 : i32
      %213 = arith.index_cast %212 : i32 to index
      %214 = memref.load %arg1[%213] : memref<32xi32, #tpu.memory_space<smem>>
      %c1_i32_114 = arith.constant 1 : i32
      %c1_i32_115 = arith.constant 1 : i32
      %c0_i32_116 = arith.constant 0 : i32
      %215 = tpu.memref_slice %arg7[%214, %c0_i32_116] : memref<512x128xf32, #tpu.memory_space<any>> -> memref<1x128xf32, #tpu.memory_space<any>>
      %216 = tpu.memref_squeeze %215 : memref<1x128xf32, #tpu.memory_space<any>> -> memref<128xf32, #tpu.memory_space<any>>
      %c0_i32_117 = arith.constant 0 : i32
      %217 = tpu.memref_slice %arg9[%c1_i32_114, %211, %c0_i32_117] : memref<3x8x128xf32, #tpu.memory_space<vmem>> -> memref<1x1x128xf32, #tpu.memory_space<vmem>>
      %218 = tpu.memref_squeeze %217 : memref<1x1x128xf32, #tpu.memory_space<vmem>> -> memref<128xf32, #tpu.memory_space<vmem>>
      %219 = tpu.memref_slice %arg10[%c1_i32_115] : memref<3x!tpu.dma_semaphore, #tpu.memory_space<semaphore_mem>> -> memref<1x!tpu.dma_semaphore, #tpu.memory_space<semaphore_mem>>
      %220 = tpu.memref_squeeze %219 : memref<1x!tpu.dma_semaphore, #tpu.memory_space<semaphore_mem>> -> memref<!tpu.dma_semaphore, #tpu.memory_space<semaphore_mem>>
      tpu.enqueue_dma source(%216 : memref<128xf32, #tpu.memory_space<any>>) target(%218 : memref<128xf32, #tpu.memory_space<vmem>>) target_semaphore(%220 : memref<!tpu.dma_semaphore, #tpu.memory_space<semaphore_mem>>)
      %c7_i32_118 = arith.constant 7 : i32
      %221 = arith.addi %150, %c7_i32_118 : i32
      %c8_i32_119 = arith.constant 8 : i32
      %222 = arith.addi %c8_i32_119, %221 : i32
      %223 = arith.index_cast %222 : i32 to index
      %224 = memref.load %arg1[%223] : memref<32xi32, #tpu.memory_space<smem>>
      %c1_i32_120 = arith.constant 1 : i32
      %c1_i32_121 = arith.constant 1 : i32
      %c0_i32_122 = arith.constant 0 : i32
      %225 = tpu.memref_slice %arg7[%224, %c0_i32_122] : memref<512x128xf32, #tpu.memory_space<any>> -> memref<1x128xf32, #tpu.memory_space<any>>
      %226 = tpu.memref_squeeze %225 : memref<1x128xf32, #tpu.memory_space<any>> -> memref<128xf32, #tpu.memory_space<any>>
      %c0_i32_123 = arith.constant 0 : i32
      %227 = tpu.memref_slice %arg9[%c1_i32_120, %221, %c0_i32_123] : memref<3x8x128xf32, #tpu.memory_space<vmem>> -> memref<1x1x128xf32, #tpu.memory_space<vmem>>
      %228 = tpu.memref_squeeze %227 : memref<1x1x128xf32, #tpu.memory_space<vmem>> -> memref<128xf32, #tpu.memory_space<vmem>>
      %229 = tpu.memref_slice %arg10[%c1_i32_121] : memref<3x!tpu.dma_semaphore, #tpu.memory_space<semaphore_mem>> -> memref<1x!tpu.dma_semaphore, #tpu.memory_space<semaphore_mem>>
      %230 = tpu.memref_squeeze %229 : memref<1x!tpu.dma_semaphore, #tpu.memory_space<semaphore_mem>> -> memref<!tpu.dma_semaphore, #tpu.memory_space<semaphore_mem>>
      tpu.enqueue_dma source(%226 : memref<128xf32, #tpu.memory_space<any>>) target(%228 : memref<128xf32, #tpu.memory_space<vmem>>) target_semaphore(%230 : memref<!tpu.dma_semaphore, #tpu.memory_space<semaphore_mem>>)
      %c1_i32_124 = arith.constant 1 : i32
    } else {
    }
    %c2_i32 = arith.constant 2 : i32
    %4 = arith.addi %arg0, %c2_i32 : i32
    %c4_i32 = arith.constant 4 : i32
    %5 = arith.cmpi slt, %4, %c4_i32 : i32
    %6 = arith.extui %5 : i1 to i32
    %c0_i32_1 = arith.constant 0 : i32
    %7 = arith.cmpi ne, %6, %c0_i32_1 : i32
    scf.if %7 {
      %c3_i32_23 = arith.constant 3 : i32
      %65 = arith.remsi %4, %c3_i32_23 : i32
      %c8_i32_24 = arith.constant 8 : i32
      %66 = arith.muli %4, %c8_i32_24 : i32
      %c0_i32_25 = arith.constant 0 : i32
      %c1_i32 = arith.constant 1 : i32
      %67 = arith.muli %c0_i32_25, %c1_i32 : i32
      %c0_i32_26 = arith.constant 0 : i32
      %68 = arith.addi %c0_i32_26, %67 : i32
      %c8_i32_27 = arith.constant 8 : i32
      %69 = arith.muli %68, %c8_i32_27 : i32
      %c0_i32_28 = arith.constant 0 : i32
      %70 = arith.addi %69, %c0_i32_28 : i32
      %71 = arith.addi %66, %70 : i32
      %72 = arith.index_cast %71 : i32 to index
      %73 = memref.load %arg1[%72] : memref<32xi32, #tpu.memory_space<smem>>
      %c0_i32_29 = arith.constant 0 : i32
      %74 = tpu.memref_slice %arg7[%73, %c0_i32_29] : memref<512x128xf32, #tpu.memory_space<any>> -> memref<1x128xf32, #tpu.memory_space<any>>
      %75 = tpu.memref_squeeze %74 : memref<1x128xf32, #tpu.memory_space<any>> -> memref<128xf32, #tpu.memory_space<any>>
      %c0_i32_30 = arith.constant 0 : i32
      %76 = tpu.memref_slice %arg9[%65, %70, %c0_i32_30] : memref<3x8x128xf32, #tpu.memory_space<vmem>> -> memref<1x1x128xf32, #tpu.memory_space<vmem>>
      %77 = tpu.memref_squeeze %76 : memref<1x1x128xf32, #tpu.memory_space<vmem>> -> memref<128xf32, #tpu.memory_space<vmem>>
      %78 = tpu.memref_slice %arg10[%65] : memref<3x!tpu.dma_semaphore, #tpu.memory_space<semaphore_mem>> -> memref<1x!tpu.dma_semaphore, #tpu.memory_space<semaphore_mem>>
      %79 = tpu.memref_squeeze %78 : memref<1x!tpu.dma_semaphore, #tpu.memory_space<semaphore_mem>> -> memref<!tpu.dma_semaphore, #tpu.memory_space<semaphore_mem>>
      tpu.enqueue_dma source(%75 : memref<128xf32, #tpu.memory_space<any>>) target(%77 : memref<128xf32, #tpu.memory_space<vmem>>) target_semaphore(%79 : memref<!tpu.dma_semaphore, #tpu.memory_space<semaphore_mem>>)
      %c1_i32_31 = arith.constant 1 : i32
      %80 = arith.addi %69, %c1_i32_31 : i32
      %81 = arith.addi %66, %80 : i32
      %82 = arith.index_cast %81 : i32 to index
      %83 = memref.load %arg1[%82] : memref<32xi32, #tpu.memory_space<smem>>
      %c0_i32_32 = arith.constant 0 : i32
      %84 = tpu.memref_slice %arg7[%83, %c0_i32_32] : memref<512x128xf32, #tpu.memory_space<any>> -> memref<1x128xf32, #tpu.memory_space<any>>
      %85 = tpu.memref_squeeze %84 : memref<1x128xf32, #tpu.memory_space<any>> -> memref<128xf32, #tpu.memory_space<any>>
      %c0_i32_33 = arith.constant 0 : i32
      %86 = tpu.memref_slice %arg9[%65, %80, %c0_i32_33] : memref<3x8x128xf32, #tpu.memory_space<vmem>> -> memref<1x1x128xf32, #tpu.memory_space<vmem>>
      %87 = tpu.memref_squeeze %86 : memref<1x1x128xf32, #tpu.memory_space<vmem>> -> memref<128xf32, #tpu.memory_space<vmem>>
      %88 = tpu.memref_slice %arg10[%65] : memref<3x!tpu.dma_semaphore, #tpu.memory_space<semaphore_mem>> -> memref<1x!tpu.dma_semaphore, #tpu.memory_space<semaphore_mem>>
      %89 = tpu.memref_squeeze %88 : memref<1x!tpu.dma_semaphore, #tpu.memory_space<semaphore_mem>> -> memref<!tpu.dma_semaphore, #tpu.memory_space<semaphore_mem>>
      tpu.enqueue_dma source(%85 : memref<128xf32, #tpu.memory_space<any>>) target(%87 : memref<128xf32, #tpu.memory_space<vmem>>) target_semaphore(%89 : memref<!tpu.dma_semaphore, #tpu.memory_space<semaphore_mem>>)
      %c2_i32_34 = arith.constant 2 : i32
      %90 = arith.addi %69, %c2_i32_34 : i32
      %91 = arith.addi %66, %90 : i32
      %92 = arith.index_cast %91 : i32 to index
      %93 = memref.load %arg1[%92] : memref<32xi32, #tpu.memory_space<smem>>
      %c0_i32_35 = arith.constant 0 : i32
      %94 = tpu.memref_slice %arg7[%93, %c0_i32_35] : memref<512x128xf32, #tpu.memory_space<any>> -> memref<1x128xf32, #tpu.memory_space<any>>
      %95 = tpu.memref_squeeze %94 : memref<1x128xf32, #tpu.memory_space<any>> -> memref<128xf32, #tpu.memory_space<any>>
      %c0_i32_36 = arith.constant 0 : i32
      %96 = tpu.memref_slice %arg9[%65, %90, %c0_i32_36] : memref<3x8x128xf32, #tpu.memory_space<vmem>> -> memref<1x1x128xf32, #tpu.memory_space<vmem>>
      %97 = tpu.memref_squeeze %96 : memref<1x1x128xf32, #tpu.memory_space<vmem>> -> memref<128xf32, #tpu.memory_space<vmem>>
      %98 = tpu.memref_slice %arg10[%65] : memref<3x!tpu.dma_semaphore, #tpu.memory_space<semaphore_mem>> -> memref<1x!tpu.dma_semaphore, #tpu.memory_space<semaphore_mem>>
      %99 = tpu.memref_squeeze %98 : memref<1x!tpu.dma_semaphore, #tpu.memory_space<semaphore_mem>> -> memref<!tpu.dma_semaphore, #tpu.memory_space<semaphore_mem>>
      tpu.enqueue_dma source(%95 : memref<128xf32, #tpu.memory_space<any>>) target(%97 : memref<128xf32, #tpu.memory_space<vmem>>) target_semaphore(%99 : memref<!tpu.dma_semaphore, #tpu.memory_space<semaphore_mem>>)
      %c3_i32_37 = arith.constant 3 : i32
      %100 = arith.addi %69, %c3_i32_37 : i32
      %101 = arith.addi %66, %100 : i32
      %102 = arith.index_cast %101 : i32 to index
      %103 = memref.load %arg1[%102] : memref<32xi32, #tpu.memory_space<smem>>
      %c0_i32_38 = arith.constant 0 : i32
      %104 = tpu.memref_slice %arg7[%103, %c0_i32_38] : memref<512x128xf32, #tpu.memory_space<any>> -> memref<1x128xf32, #tpu.memory_space<any>>
      %105 = tpu.memref_squeeze %104 : memref<1x128xf32, #tpu.memory_space<any>> -> memref<128xf32, #tpu.memory_space<any>>
      %c0_i32_39 = arith.constant 0 : i32
      %106 = tpu.memref_slice %arg9[%65, %100, %c0_i32_39] : memref<3x8x128xf32, #tpu.memory_space<vmem>> -> memref<1x1x128xf32, #tpu.memory_space<vmem>>
      %107 = tpu.memref_squeeze %106 : memref<1x1x128xf32, #tpu.memory_space<vmem>> -> memref<128xf32, #tpu.memory_space<vmem>>
      %108 = tpu.memref_slice %arg10[%65] : memref<3x!tpu.dma_semaphore, #tpu.memory_space<semaphore_mem>> -> memref<1x!tpu.dma_semaphore, #tpu.memory_space<semaphore_mem>>
      %109 = tpu.memref_squeeze %108 : memref<1x!tpu.dma_semaphore, #tpu.memory_space<semaphore_mem>> -> memref<!tpu.dma_semaphore, #tpu.memory_space<semaphore_mem>>
      tpu.enqueue_dma source(%105 : memref<128xf32, #tpu.memory_space<any>>) target(%107 : memref<128xf32, #tpu.memory_space<vmem>>) target_semaphore(%109 : memref<!tpu.dma_semaphore, #tpu.memory_space<semaphore_mem>>)
      %c4_i32_40 = arith.constant 4 : i32
      %110 = arith.addi %69, %c4_i32_40 : i32
      %111 = arith.addi %66, %110 : i32
      %112 = arith.index_cast %111 : i32 to index
      %113 = memref.load %arg1[%112] : memref<32xi32, #tpu.memory_space<smem>>
      %c0_i32_41 = arith.constant 0 : i32
      %114 = tpu.memref_slice %arg7[%113, %c0_i32_41] : memref<512x128xf32, #tpu.memory_space<any>> -> memref<1x128xf32, #tpu.memory_space<any>>
      %115 = tpu.memref_squeeze %114 : memref<1x128xf32, #tpu.memory_space<any>> -> memref<128xf32, #tpu.memory_space<any>>
      %c0_i32_42 = arith.constant 0 : i32
      %116 = tpu.memref_slice %arg9[%65, %110, %c0_i32_42] : memref<3x8x128xf32, #tpu.memory_space<vmem>> -> memref<1x1x128xf32, #tpu.memory_space<vmem>>
      %117 = tpu.memref_squeeze %116 : memref<1x1x128xf32, #tpu.memory_space<vmem>> -> memref<128xf32, #tpu.memory_space<vmem>>
      %118 = tpu.memref_slice %arg10[%65] : memref<3x!tpu.dma_semaphore, #tpu.memory_space<semaphore_mem>> -> memref<1x!tpu.dma_semaphore, #tpu.memory_space<semaphore_mem>>
      %119 = tpu.memref_squeeze %118 : memref<1x!tpu.dma_semaphore, #tpu.memory_space<semaphore_mem>> -> memref<!tpu.dma_semaphore, #tpu.memory_space<semaphore_mem>>
      tpu.enqueue_dma source(%115 : memref<128xf32, #tpu.memory_space<any>>) target(%117 : memref<128xf32, #tpu.memory_space<vmem>>) target_semaphore(%119 : memref<!tpu.dma_semaphore, #tpu.memory_space<semaphore_mem>>)
      %c5_i32 = arith.constant 5 : i32
      %120 = arith.addi %69, %c5_i32 : i32
      %121 = arith.addi %66, %120 : i32
      %122 = arith.index_cast %121 : i32 to index
      %123 = memref.load %arg1[%122] : memref<32xi32, #tpu.memory_space<smem>>
      %c0_i32_43 = arith.constant 0 : i32
      %124 = tpu.memref_slice %arg7[%123, %c0_i32_43] : memref<512x128xf32, #tpu.memory_space<any>> -> memref<1x128xf32, #tpu.memory_space<any>>
      %125 = tpu.memref_squeeze %124 : memref<1x128xf32, #tpu.memory_space<any>> -> memref<128xf32, #tpu.memory_space<any>>
      %c0_i32_44 = arith.constant 0 : i32
      %126 = tpu.memref_slice %arg9[%65, %120, %c0_i32_44] : memref<3x8x128xf32, #tpu.memory_space<vmem>> -> memref<1x1x128xf32, #tpu.memory_space<vmem>>
      %127 = tpu.memref_squeeze %126 : memref<1x1x128xf32, #tpu.memory_space<vmem>> -> memref<128xf32, #tpu.memory_space<vmem>>
      %128 = tpu.memref_slice %arg10[%65] : memref<3x!tpu.dma_semaphore, #tpu.memory_space<semaphore_mem>> -> memref<1x!tpu.dma_semaphore, #tpu.memory_space<semaphore_mem>>
      %129 = tpu.memref_squeeze %128 : memref<1x!tpu.dma_semaphore, #tpu.memory_space<semaphore_mem>> -> memref<!tpu.dma_semaphore, #tpu.memory_space<semaphore_mem>>
      tpu.enqueue_dma source(%125 : memref<128xf32, #tpu.memory_space<any>>) target(%127 : memref<128xf32, #tpu.memory_space<vmem>>) target_semaphore(%129 : memref<!tpu.dma_semaphore, #tpu.memory_space<semaphore_mem>>)
      %c6_i32 = arith.constant 6 : i32
      %130 = arith.addi %69, %c6_i32 : i32
      %131 = arith.addi %66, %130 : i32
      %132 = arith.index_cast %131 : i32 to index
      %133 = memref.load %arg1[%132] : memref<32xi32, #tpu.memory_space<smem>>
      %c0_i32_45 = arith.constant 0 : i32
      %134 = tpu.memref_slice %arg7[%133, %c0_i32_45] : memref<512x128xf32, #tpu.memory_space<any>> -> memref<1x128xf32, #tpu.memory_space<any>>
      %135 = tpu.memref_squeeze %134 : memref<1x128xf32, #tpu.memory_space<any>> -> memref<128xf32, #tpu.memory_space<any>>
      %c0_i32_46 = arith.constant 0 : i32
      %136 = tpu.memref_slice %arg9[%65, %130, %c0_i32_46] : memref<3x8x128xf32, #tpu.memory_space<vmem>> -> memref<1x1x128xf32, #tpu.memory_space<vmem>>
      %137 = tpu.memref_squeeze %136 : memref<1x1x128xf32, #tpu.memory_space<vmem>> -> memref<128xf32, #tpu.memory_space<vmem>>
      %138 = tpu.memref_slice %arg10[%65] : memref<3x!tpu.dma_semaphore, #tpu.memory_space<semaphore_mem>> -> memref<1x!tpu.dma_semaphore, #tpu.memory_space<semaphore_mem>>
      %139 = tpu.memref_squeeze %138 : memref<1x!tpu.dma_semaphore, #tpu.memory_space<semaphore_mem>> -> memref<!tpu.dma_semaphore, #tpu.memory_space<semaphore_mem>>
      tpu.enqueue_dma source(%135 : memref<128xf32, #tpu.memory_space<any>>) target(%137 : memref<128xf32, #tpu.memory_space<vmem>>) target_semaphore(%139 : memref<!tpu.dma_semaphore, #tpu.memory_space<semaphore_mem>>)
      %c7_i32 = arith.constant 7 : i32
      %140 = arith.addi %69, %c7_i32 : i32
      %141 = arith.addi %66, %140 : i32
      %142 = arith.index_cast %141 : i32 to index
      %143 = memref.load %arg1[%142] : memref<32xi32, #tpu.memory_space<smem>>
      %c0_i32_47 = arith.constant 0 : i32
      %144 = tpu.memref_slice %arg7[%143, %c0_i32_47] : memref<512x128xf32, #tpu.memory_space<any>> -> memref<1x128xf32, #tpu.memory_space<any>>
      %145 = tpu.memref_squeeze %144 : memref<1x128xf32, #tpu.memory_space<any>> -> memref<128xf32, #tpu.memory_space<any>>
      %c0_i32_48 = arith.constant 0 : i32
      %146 = tpu.memref_slice %arg9[%65, %140, %c0_i32_48] : memref<3x8x128xf32, #tpu.memory_space<vmem>> -> memref<1x1x128xf32, #tpu.memory_space<vmem>>
      %147 = tpu.memref_squeeze %146 : memref<1x1x128xf32, #tpu.memory_space<vmem>> -> memref<128xf32, #tpu.memory_space<vmem>>
      %148 = tpu.memref_slice %arg10[%65] : memref<3x!tpu.dma_semaphore, #tpu.memory_space<semaphore_mem>> -> memref<1x!tpu.dma_semaphore, #tpu.memory_space<semaphore_mem>>
      %149 = tpu.memref_squeeze %148 : memref<1x!tpu.dma_semaphore, #tpu.memory_space<semaphore_mem>> -> memref<!tpu.dma_semaphore, #tpu.memory_space<semaphore_mem>>
      tpu.enqueue_dma source(%145 : memref<128xf32, #tpu.memory_space<any>>) target(%147 : memref<128xf32, #tpu.memory_space<vmem>>) target_semaphore(%149 : memref<!tpu.dma_semaphore, #tpu.memory_space<semaphore_mem>>)
      %c1_i32_49 = arith.constant 1 : i32
    } else {
    }
    %c0_i32_2 = arith.constant 0 : i32
    %c0_i32_3 = arith.constant 0 : i32
    %8 = tpu.memref_slice %arg7[%c0_i32_2, %c0_i32_3] : memref<512x128xf32, #tpu.memory_space<any>> -> memref<8x128xf32, #tpu.memory_space<any>>
    %c0_i32_4 = arith.constant 0 : i32
    %c0_i32_5 = arith.constant 0 : i32
    %9 = tpu.memref_slice %arg9[%0, %c0_i32_4, %c0_i32_5] : memref<3x8x128xf32, #tpu.memory_space<vmem>> -> memref<1x8x128xf32, #tpu.memory_space<vmem>>
    %10 = tpu.memref_squeeze %9 : memref<1x8x128xf32, #tpu.memory_space<vmem>> -> memref<8x128xf32, #tpu.memory_space<vmem>>
    %11 = tpu.memref_slice %arg10[%0] : memref<3x!tpu.dma_semaphore, #tpu.memory_space<semaphore_mem>> -> memref<1x!tpu.dma_semaphore, #tpu.memory_space<semaphore_mem>>
    %12 = tpu.memref_squeeze %11 : memref<1x!tpu.dma_semaphore, #tpu.memory_space<semaphore_mem>> -> memref<!tpu.dma_semaphore, #tpu.memory_space<semaphore_mem>>
    tpu.wait_dma2 semaphore(%12 : memref<!tpu.dma_semaphore, #tpu.memory_space<semaphore_mem>>) src(%8 : memref<8x128xf32, #tpu.memory_space<any>>) dst(%10 : memref<8x128xf32, #tpu.memory_space<vmem>>)
    %c2_i32_6 = arith.constant 2 : i32
    %13 = arith.remsi %arg0, %c2_i32_6 : i32
    %c8_i32 = arith.constant 8 : i32
    %14 = arith.muli %13, %c8_i32 : i32
    %15 = tpu.assume_multiple %14, 8 : i32
    %16 = arith.index_cast %0 : i32 to index
    %c0 = arith.constant 0 : index
    %c0_7 = arith.constant 0 : index
    %17 = vector.load %arg9[%16, %c0, %c0_7] : memref<3x8x128xf32, #tpu.memory_space<vmem>>, vector<1x8x128xf32>
    %18 = vector.shape_cast %17 : vector<1x8x128xf32> to vector<8x128xf32>
    %19 = arith.index_cast %15 : i32 to index
    %c0_8 = arith.constant 0 : index
    %20 = vector.load %arg3[%19, %c0_8] : memref<16x128xf32, #tpu.memory_space<vmem>>, vector<8x128xf32>
    %21 = arith.addf %18, %20 : vector<8x128xf32>
    %c0_9 = arith.constant 0 : index
    %c0_10 = arith.constant 0 : index
    %22 = vector.load %arg4[%c0_9, %c0_10] : memref<2x128xf32, #tpu.memory_space<vmem>>, vector<2x128xf32>
    %23 = vector.extract_strided_slice %22 {offsets = [0, 0], sizes = [1, 128], strides = [1, 1]} : vector<2x128xf32> to vector<1x128xf32>
    %24 = vector.shape_cast %23 : vector<1x128xf32> to vector<128xf32>
    %25 = vector.shape_cast %24 : vector<128xf32> to vector<1x128xf32>
    %26 = vector.extract_strided_slice %22 {offsets = [1, 0], sizes = [1, 128], strides = [1, 1]} : vector<2x128xf32> to vector<1x128xf32>
    %27 = vector.shape_cast %26 : vector<1x128xf32> to vector<128xf32>
    %28 = vector.extract_strided_slice %22 {offsets = [0, 0], sizes = [1, 128], strides = [1, 1]} : vector<2x128xf32> to vector<1x128xf32>
    %29 = vector.shape_cast %28 : vector<1x128xf32> to vector<128xf32>
    %30 = arith.subf %27, %29 : vector<128xf32>
    %31 = vector.shape_cast %30 : vector<128xf32> to vector<1x128xf32>
    %32 = vector.broadcast %25 : vector<1x128xf32> to vector<8x128xf32>
    %33 = arith.addf %21, %32 : vector<8x128xf32>
    %c0_11 = arith.constant 0 : index
    %c0_12 = arith.constant 0 : index
    %34 = vector.load %arg2[%c0_11, %c0_12] : memref<8x1xi32, #tpu.memory_space<vmem>>, vector<8x1xi32>
    %35 = arith.sitofp %34 : vector<8x1xi32> to vector<8x1xf32>
    %36 = vector.broadcast %35 : vector<8x1xf32> to vector<8x128xf32>
    %37 = vector.broadcast %31 : vector<1x128xf32> to vector<8x128xf32>
    %38 = arith.mulf %36, %37 : vector<8x128xf32>
    %39 = arith.addf %33, %38 : vector<8x128xf32>
    %cst = arith.constant dense<0.000000e+00> : vector<8xf32>
    %40 = vector.multi_reduction <add>, %39, %cst [1] : vector<8x128xf32> to vector<8xf32>
    %41 = vector.shape_cast %40 : vector<8xf32> to vector<8x1xf32>
    %cst_13 = arith.constant 1.280000e+02 : f32
    %42 = vector.broadcast %cst_13 : f32 to vector<8x1xf32>
    %43 = arith.divf %41, %42 : vector<8x1xf32>
    %44 = arith.mulf %39, %39 : vector<8x128xf32>
    %cst_14 = arith.constant dense<0.000000e+00> : vector<8xf32>
    %45 = vector.multi_reduction <add>, %44, %cst_14 [1] : vector<8x128xf32> to vector<8xf32>
    %46 = vector.shape_cast %45 : vector<8xf32> to vector<8x1xf32>
    %cst_15 = arith.constant 1.280000e+02 : f32
    %47 = vector.broadcast %cst_15 : f32 to vector<8x1xf32>
    %48 = arith.divf %46, %47 : vector<8x1xf32>
    %49 = arith.mulf %43, %43 : vector<8x1xf32>
    %50 = arith.subf %48, %49 : vector<8x1xf32>
    %cst_16 = arith.constant 9.99999996E-13 : f32
    %51 = vector.broadcast %cst_16 : f32 to vector<8x1xf32>
    %52 = arith.addf %50, %51 : vector<8x1xf32>
    %53 = math.rsqrt %52 : vector<8x1xf32>
    %54 = vector.broadcast %43 : vector<8x1xf32> to vector<8x128xf32>
    %55 = arith.subf %39, %54 : vector<8x128xf32>
    %c0_17 = arith.constant 0 : index
    %c0_18 = arith.constant 0 : index
    %56 = vector.load %arg5[%c0_17, %c0_18] : memref<1x128xf32, #tpu.memory_space<vmem>>, vector<1x128xf32>
    %57 = vector.broadcast %53 : vector<8x1xf32> to vector<8x128xf32>
    %58 = vector.broadcast %56 : vector<1x128xf32> to vector<8x128xf32>
    %59 = arith.mulf %57, %58 : vector<8x128xf32>
    %60 = arith.mulf %55, %59 : vector<8x128xf32>
    %c0_19 = arith.constant 0 : index
    %c0_20 = arith.constant 0 : index
    %61 = vector.load %arg6[%c0_19, %c0_20] : memref<1x128xf32, #tpu.memory_space<vmem>>, vector<1x128xf32>
    %62 = vector.broadcast %61 : vector<1x128xf32> to vector<8x128xf32>
    %63 = arith.addf %60, %62 : vector<8x128xf32>
    %c0_21 = arith.constant 0 : index
    %c0_22 = arith.constant 0 : index
    %64 = vector.load %arg8[%c0_21, %c0_22] : memref<8x128xf32, #tpu.memory_space<vmem>>, vector<8x128xf32>
    tpu.vector_store %arg8[%c0_21, %c0_22], %63 {strides = array<i32>} : memref<8x128xf32, #tpu.memory_space<vmem>>, vector<8x128xf32>,
    return
  }
  func.func @transform_0(%arg0: i32, %arg1: memref<32xi32, #tpu.memory_space<smem>>) -> (i32, i32) {
    %c0_i32 = arith.constant 0 : i32
    %c0_i32_0 = arith.constant 0 : i32
    return %arg0, %c0_i32 : i32, i32
  }
  func.func @transform_1(%arg0: i32, %arg1: memref<32xi32, #tpu.memory_space<smem>>) -> (i32, i32) {
    %c0_i32 = arith.constant 0 : i32
    %c0_i32_0 = arith.constant 0 : i32
    %c0_i32_1 = arith.constant 0 : i32
    return %c0_i32, %c0_i32_0 : i32, i32
  }
  func.func @transform_2(%arg0: i32, %arg1: memref<32xi32, #tpu.memory_space<smem>>) -> (i32, i32) {
    %c0_i32 = arith.constant 0 : i32
    %c0_i32_0 = arith.constant 0 : i32
    %c0_i32_1 = arith.constant 0 : i32
    return %c0_i32, %c0_i32_0 : i32, i32
  }
  func.func @transform_3(%arg0: i32, %arg1: memref<32xi32, #tpu.memory_space<smem>>) -> (i32, i32) {
    %c0_i32 = arith.constant 0 : i32
    %c0_i32_0 = arith.constant 0 : i32
    %c0_i32_1 = arith.constant 0 : i32
    return %c0_i32, %c0_i32_0 : i32, i32
  }
  func.func @transform_4(%arg0: i32, %arg1: memref<32xi32, #tpu.memory_space<smem>>) -> (i32, i32) {
    %c0_i32 = arith.constant 0 : i32
    %c0_i32_0 = arith.constant 0 : i32
    %c0_i32_1 = arith.constant 0 : i32
    return %c0_i32, %c0_i32_0 : i32, i32
  }
  func.func @transform_6(%arg0: i32, %arg1: memref<32xi32, #tpu.memory_space<smem>>) -> (i32, i32) {
    %c0_i32 = arith.constant 0 : i32
    %c0_i32_0 = arith.constant 0 : i32
    return %arg0, %c0_i32 : i32, i32
  }
}

</mosaic_0001>

<llo_original>
// kernel: tpu_custom_call.1
$region0: #{tpu_custom_call.1}
  #allocation0 [shape = 'u32[]', space=smem, size = 0x4, offset = 0x4, fixed_abs, tag = 'smem constant byte address 0x4 - core index']
  #allocation1 [shape = 'u32[144,128]{1,0:T(1,128)}', space=vmem, size = 0x12000, scoped, tag = 'internal scratch']
  #allocation2 [shape = 'f32[3,8,128]{2,1,0:T(8,128)}', space=vmem, size = 0x3000, scoped, tag = 'scratch operand']
  #allocation3 [shape = 's32[3]{0}', space=sflag, size = 0xc, scoped, tag = 'scratch operand']
  #allocation4 [shape = 's32[1]{0}', space=sflag, size = 0x4, scoped, tag = 'scoped memory for tpu_custom_call.1']
  #allocation5 [shape = 'u8[512]{0}', space=smem, size = 0x200, scoped, tag = 'prefetched SMEM operand 0']
  #allocation8 [shape = 's32[]', space=sflag, size = 0x4, offset = 0, fixed_abs, tag = 'sflag constant byte address 0x0 - dummy sync flag']
  #allocation9 [shape = 's32[]', space=sflag, size = 0x4, offset = 0, fixed_abs, tag = 'sflag constant byte address 0x0 - dummy sync flag']
  #allocation10 [shape = 'u32[]', space=smem, size = 0x4, offset = 0x44, fixed_abs, tag = 'smem constant byte address 0x44 - assertion arg 0']
  #allocation11 [shape = 'u32[]', space=smem, size = 0x4, offset = 0x48, fixed_abs, tag = 'smem constant byte address 0x48 - assertion arg 1']
  #allocation12 [shape = 's32[]', space=sflag, size = 0x4, offset = 0, fixed_abs, tag = 'sflag constant byte address 0x0 - dummy sync flag']
  #allocation13 [shape = 's32[]', space=sflag, size = 0x4, offset = 0, fixed_abs, tag = 'sflag constant byte address 0x0 - dummy sync flag']
  #allocation14 [shape = 's32[]', space=sflag, size = 0x4, offset = 0, fixed_abs, tag = 'sflag constant byte address 0x0 - dummy sync flag']
  #allocation15 [shape = 's32[]', space=sflag, size = 0x4, offset = 0, fixed_abs, tag = 'sflag constant byte address 0x0 - dummy sync flag']
  #allocation16 [shape = 's32[]', space=sflag, size = 0x4, offset = 0, fixed_abs, tag = 'sflag constant byte address 0x0 - dummy sync flag']
  #allocation17 [shape = 's32[]', space=sflag, size = 0x4, offset = 0, fixed_abs, tag = 'sflag constant byte address 0x0 - dummy sync flag']
  #allocation18 [shape = 's32[]', space=sflag, size = 0x4, offset = 0, fixed_abs, tag = 'sflag constant byte address 0x0 - dummy sync flag']
  #allocation19 [shape = 's32[]', space=sflag, size = 0x4, offset = 0, fixed_abs, tag = 'sflag constant byte address 0x0 - dummy sync flag']
  #allocation20 [shape = 's32[]', space=sflag, size = 0x4, offset = 0, fixed_abs, tag = 'sflag constant byte address 0x0 - dummy sync flag']
  #allocation21 [shape = 's32[]', space=sflag, size = 0x4, offset = 0, fixed_abs, tag = 'sflag constant byte address 0x0 - dummy sync flag']
  #allocation22 [shape = 's32[]', space=sflag, size = 0x4, offset = 0, fixed_abs, tag = 'sflag constant byte address 0x0 - dummy sync flag']
  #allocation23 [shape = 's32[]', space=sflag, size = 0x4, offset = 0, fixed_abs, tag = 'sflag constant byte address 0x0 - dummy sync flag']
  #allocation24 [shape = 's32[]', space=sflag, size = 0x4, offset = 0, fixed_abs, tag = 'sflag constant byte address 0x0 - dummy sync flag']
  #allocation25 [shape = 's32[]', space=sflag, size = 0x4, offset = 0, fixed_abs, tag = 'sflag constant byte address 0x0 - dummy sync flag']
  #allocation26 [shape = 's32[]', space=sflag, size = 0x4, offset = 0, fixed_abs, tag = 'sflag constant byte address 0x0 - dummy sync flag']
  #allocation27 [shape = 's32[]', space=sflag, size = 0x4, offset = 0, fixed_abs, tag = 'sflag constant byte address 0x0 - dummy sync flag']
  #allocation28 [shape = 's32[]', space=sflag, size = 0x4, offset = 0, fixed_abs, tag = 'sflag constant byte address 0x0 - dummy sync flag']
  #allocation29 [shape = 's32[]', space=sflag, size = 0x4, offset = 0, fixed_abs, tag = 'sflag constant byte address 0x0 - dummy sync flag']
  #allocation30 [shape = 's32[]', space=sflag, size = 0x4, offset = 0, fixed_abs, tag = 'sflag constant byte address 0x0 - dummy sync flag']
  #allocation31 [shape = 's32[]', space=sflag, size = 0x4, offset = 0, fixed_abs, tag = 'sflag constant byte address 0x0 - dummy sync flag']
  #allocation32 [shape = 's32[]', space=sflag, size = 0x4, offset = 0, fixed_abs, tag = 'sflag constant byte address 0x0 - dummy sync flag']
  #allocation33 [shape = 's32[]', space=sflag, size = 0x4, offset = 0, fixed_abs, tag = 'sflag constant byte address 0x0 - dummy sync flag']
  #allocation34 [shape = 's32[]', space=sflag, size = 0x4, offset = 0, fixed_abs, tag = 'sflag constant byte address 0x0 - dummy sync flag']
  #allocation35 [shape = 's32[]', space=sflag, size = 0x4, offset = 0, fixed_abs, tag = 'sflag constant byte address 0x0 - dummy sync flag']
  #allocation36 [shape = 's32[]', space=sflag, size = 0x4, offset = 0, fixed_abs, tag = 'sflag constant byte address 0x0 - dummy sync flag']
  #allocation37 [shape = 's32[]', space=sflag, size = 0x4, offset = 0, fixed_abs, tag = 'sflag constant byte address 0x0 - dummy sync flag']
  #allocation38 [shape = 's32[]', space=sflag, size = 0x4, offset = 0, fixed_abs, tag = 'sflag constant byte address 0x0 - dummy sync flag']
  #allocation39 [shape = 's32[]', space=sflag, size = 0x4, offset = 0, fixed_abs, tag = 'sflag constant byte address 0x0 - dummy sync flag']
  #allocation40 [shape = 's32[]', space=sflag, size = 0x4, offset = 0, fixed_abs, tag = 'sflag constant byte address 0x0 - dummy sync flag']
  #allocation41 [shape = 's32[]', space=sflag, size = 0x4, offset = 0, fixed_abs, tag = 'sflag constant byte address 0x0 - dummy sync flag']
  #allocation42 [shape = 's32[]', space=sflag, size = 0x4, offset = 0, fixed_abs, tag = 'sflag constant byte address 0x0 - dummy sync flag']
  #allocation43 [shape = 's32[]', space=sflag, size = 0x4, offset = 0, fixed_abs, tag = 'sflag constant byte address 0x0 - dummy sync flag']
  #allocation44 [shape = 's32[]', space=sflag, size = 0x4, offset = 0, fixed_abs, tag = 'sflag constant byte address 0x0 - dummy sync flag']
  #allocation45 [shape = 's32[]', space=sflag, size = 0x4, offset = 0, fixed_abs, tag = 'sflag constant byte address 0x0 - dummy sync flag']
  #allocation46 [shape = 's32[]', space=sflag, size = 0x4, offset = 0, fixed_abs, tag = 'sflag constant byte address 0x0 - dummy sync flag']
  #allocation47 [shape = 's32[]', space=sflag, size = 0x4, offset = 0, fixed_abs, tag = 'sflag constant byte address 0x0 - dummy sync flag']
  #allocation48 [shape = 's32[]', space=sflag, size = 0x4, offset = 0, fixed_abs, tag = 'sflag constant byte address 0x0 - dummy sync flag']
  #allocation49 [shape = 's32[]', space=sflag, size = 0x4, offset = 0, fixed_abs, tag = 'sflag constant byte address 0x0 - dummy sync flag']
  #allocation50 [shape = 's32[]', space=sflag, size = 0x4, offset = 0, fixed_abs, tag = 'sflag constant byte address 0x0 - dummy sync flag']
  #allocation51 [shape = 's32[]', space=sflag, size = 0x4, offset = 0, fixed_abs, tag = 'sflag constant byte address 0x0 - dummy sync flag']
  #allocation52 [shape = 's32[]', space=sflag, size = 0x4, offset = 0, fixed_abs, tag = 'sflag constant byte address 0x0 - dummy sync flag']
  #allocation53 [shape = 's32[]', space=sflag, size = 0x4, offset = 0, fixed_abs, tag = 'sflag constant byte address 0x0 - dummy sync flag']
  #allocation54 [shape = 's32[]', space=sflag, size = 0x4, offset = 0, fixed_abs, tag = 'sflag constant byte address 0x0 - dummy sync flag']
  #allocation55 [shape = 's32[]', space=sflag, size = 0x4, offset = 0, fixed_abs, tag = 'sflag constant byte address 0x0 - dummy sync flag']
  #allocation56 [shape = 's32[]', space=sflag, size = 0x4, offset = 0, fixed_abs, tag = 'sflag constant byte address 0x0 - dummy sync flag']
  #allocation57 [shape = 's32[]', space=sflag, size = 0x4, offset = 0, fixed_abs, tag = 'sflag constant byte address 0x0 - dummy sync flag']
  %s0 = inlined_call_operand.vmem [shape: s32[32], index: 0, kind: input, shape index: {}]
  %s1 = inlined_call_operand.vmem [shape: s32[32,1], index: 1, kind: input, shape index: {}]
  %s2 = inlined_call_operand.vmem [shape: f32[16,128], index: 2, kind: input, shape index: {}]
  %s3 = inlined_call_operand.vmem [shape: f32[2,128], index: 3, kind: input, shape index: {}]
  %s4 = inlined_call_operand.vmem [shape: f32[1,128], index: 4, kind: input, shape index: {}]
  %s5 = inlined_call_operand.vmem [shape: f32[1,128], index: 5, kind: input, shape index: {}]
  %s6 = inlined_call_operand.hbm [shape: f32[512,128], index: 6, kind: input, shape index: {}]
  %s7 = inlined_call_operand.hbm [shape: f32[32,128], index: 7, kind: output, shape index: {}]
  %s8 = sld [smem:[#allocation0]]
  $region157: #{tpu_custom_call.1} parent=0
    _
  %s10 = ssub.s32 1, %s8
  %s11 = scalar_select 0, %s10, %s8
  %s12 = sshll.u32 %s0, 4
  %s13 = int_to_ptr.vmem [resolvable:$true] %s12
  %15 = dma.vmem_to_smem %s13, 16, [#allocation5], [#allocation4]
  %16 = dma.done [#allocation4], 16
  %17 = sfence
  $region1: #{tpu_custom_call.1} parent=0
    #allocation6 [shape = 'u8[8192]{0}', space=vmem, size = 0x2000, scoped, tag = 'output window, operand 0']
    #allocation7 [shape = 's32[2]{0}', space=sflag, size = 0x8, scoped, tag = 'scoped memory for tpu_custom_call.1']
    %18 = vsyncpa [#allocation7], 0
    %s19 = scalar_lea.sflag [#allocation7], 1
    %20 = vsyncpa %s19, 0
    loop: start=0, step=1, limit=6
    $region2: #{tpu_custom_call.1} parent=1 // loop_pre_header
      _
    $region3: #{tpu_custom_call.1} parent=1 // loop_header
      %s22 = sphi 0, %s26
      %p23 = scmp.ge.s32.totalorder %s22, 6
      %s32 = sphi 0, %s34
      %s35 = sphi 0, %s32
      %s36 = sphi 0, %s35
      %s52 = sphi 0, %s36
      %s56 = sphi 0, %s56
      %s58 = sphi 0, %s56
      %s59 = sphi 0, %s58
      %s73 = sphi 0, %s59
      %s77 = sphi 0, %s77
      %s79 = sphi 0, %s77
      %s80 = sphi 0, %s79
      %s94 = sphi 0, %s80
      %s98 = sphi 0, %s98
      %s100 = sphi 0, %s98
      %s101 = sphi 0, %s100
      %s115 = sphi 0, %s101
      %s119 = sphi 0, %s119
      %s121 = sphi 0, %s119
      %s122 = sphi 0, %s121
      %s136 = sphi 0, %s122
      %s142 = sphi 0, %s144
      %s145 = sphi 0, %s142
      %s146 = sphi 0, %s145
      %s162 = sphi 0, %s146
    $region4: #{tpu_custom_call.1} parent=1 // loop_header_branch
      %25 = sbr.rel (%p23) target = $region8
    $region5: #{tpu_custom_call.1} parent=1 // loop_body
      %s27 = ssub.s32 %s22, 1
      %s28 = ssub.s32 %s22, 2
      %s29 = sadd.s32 %s22, 1
      %s30 = ssub.s32 %s22, %s29
      %p31 = scmp.eq.s32.totalorder %s30, 0
      %s33 = sadd.s32 %s32, 1
      %s34 = scalar_select %p31, %s32, %s33
      %p37 = pneg %p31
      %p38 = scmp.eq.s32.totalorder %s22, 3
      %p39 = por %p37, %p38
      %p40 = scmp.ne.s32.totalorder %s32, %s35
      %p41 = scmp.eq.s32.totalorder %s22, 0
      %p42 = por %p40, %p41
      %p43 = scmp.ne.s32.totalorder %s32, %s35
      %p44 = scmp.eq.s32.totalorder %s27, 3
      %p45 = por %p43, %p44
      %p46 = scmp.ne.s32.totalorder %s35, %s36
      %p47 = scmp.eq.s32.totalorder %s27, 0
      %p48 = por %p46, %p47
      %p49 = scmp.ne.s32.totalorder %s35, %s36
      %p50 = scmp.eq.s32.totalorder %s28, 3
      %p51 = por %p49, %p50
      %p53 = scmp.ne.s32.totalorder %s36, %s52
      %p54 = scmp.eq.s32.totalorder %s28, 0
      %p55 = por %p53, %p54
      %s57 = sadd.s32 %s56, 1
      %p60 = scmp.eq.s32.totalorder %s22, 3
      %p61 = scmp.ne.s32.totalorder %s56, %s58
      %p62 = scmp.eq.s32.totalorder %s22, 0
      %p63 = por %p61, %p62
      %p64 = scmp.ne.s32.totalorder %s56, %s58
      %p65 = scmp.eq.s32.totalorder %s27, 3
      %p66 = por %p64, %p65
      %p67 = scmp.ne.s32.totalorder %s58, %s59
      %p68 = scmp.eq.s32.totalorder %s27, 0
      %p69 = por %p67, %p68
      %p70 = scmp.ne.s32.totalorder %s58, %s59
      %p71 = scmp.eq.s32.totalorder %s28, 3
      %p72 = por %p70, %p71
      %p74 = scmp.ne.s32.totalorder %s59, %s73
      %p75 = scmp.eq.s32.totalorder %s28, 0
      %p76 = por %p74, %p75
      %s78 = sadd.s32 %s77, 1
      %p81 = scmp.eq.s32.totalorder %s22, 3
      %p82 = scmp.ne.s32.totalorder %s77, %s79
      %p83 = scmp.eq.s32.totalorder %s22, 0
      %p84 = por %p82, %p83
      %p85 = scmp.ne.s32.totalorder %s77, %s79
      %p86 = scmp.eq.s32.totalorder %s27, 3
      %p87 = por %p85, %p86
      %p88 = scmp.ne.s32.totalorder %s79, %s80
      %p89 = scmp.eq.s32.totalorder %s27, 0
      %p90 = por %p88, %p89
      %p91 = scmp.ne.s32.totalorder %s79, %s80
      %p92 = scmp.eq.s32.totalorder %s28, 3
      %p93 = por %p91, %p92
      %p95 = scmp.ne.s32.totalorder %s80, %s94
      %p96 = scmp.eq.s32.totalorder %s28, 0
      %p97 = por %p95, %p96
      %s99 = sadd.s32 %s98, 1
      %p102 = scmp.eq.s32.totalorder %s22, 3
      %p103 = scmp.ne.s32.totalorder %s98, %s100
      %p104 = scmp.eq.s32.totalorder %s22, 0
      %p105 = por %p103, %p104
      %p106 = scmp.ne.s32.totalorder %s98, %s100
      %p107 = scmp.eq.s32.totalorder %s27, 3
      %p108 = por %p106, %p107
      %p109 = scmp.ne.s32.totalorder %s100, %s101
      %p110 = scmp.eq.s32.totalorder %s27, 0
      %p111 = por %p109, %p110
      %p112 = scmp.ne.s32.totalorder %s100, %s101
      %p113 = scmp.eq.s32.totalorder %s28, 3
      %p114 = por %p112, %p113
      %p116 = scmp.ne.s32.totalorder %s101, %s115
      %p117 = scmp.eq.s32.totalorder %s28, 0
      %p118 = por %p116, %p117
      %s120 = sadd.s32 %s119, 1
      %p123 = scmp.eq.s32.totalorder %s22, 3
      %p124 = scmp.ne.s32.totalorder %s119, %s121
      %p125 = scmp.eq.s32.totalorder %s22, 0
      %p126 = por %p124, %p125
      %p127 = scmp.ne.s32.totalorder %s119, %s121
      %p128 = scmp.eq.s32.totalorder %s27, 3
      %p129 = por %p127, %p128
      %p130 = scmp.ne.s32.totalorder %s121, %s122
      %p131 = scmp.eq.s32.totalorder %s27, 0
      %p132 = por %p130, %p131
      %p133 = scmp.ne.s32.totalorder %s121, %s122
      %p134 = scmp.eq.s32.totalorder %s28, 3
      %p135 = por %p133, %p134
      %p137 = scmp.ne.s32.totalorder %s122, %s136
      %p138 = scmp.eq.s32.totalorder %s28, 0
      %p139 = por %p137, %p138
      %s140 = ssub.s32 %s22, %s29
      %p141 = scmp.eq.s32.totalorder %s140, 0
      %s143 = sadd.s32 %s142, 1
      %s144 = scalar_select %p141, %s142, %s143
      %p147 = pneg %p141
      %p148 = scmp.eq.s32.totalorder %s22, 3
      %p149 = por %p147, %p148
      %p150 = scmp.ne.s32.totalorder %s142, %s145
      %p151 = scmp.eq.s32.totalorder %s22, 0
      %p152 = por %p150, %p151
      %p153 = scmp.ne.s32.totalorder %s142, %s145
      %p154 = scmp.eq.s32.totalorder %s27, 3
      %p155 = por %p153, %p154
      %p156 = scmp.ne.s32.totalorder %s145, %s146
      %p157 = scmp.eq.s32.totalorder %s27, 0
      %p158 = por %p156, %p157
      %p159 = scmp.ne.s32.totalorder %s145, %s146
      %p160 = scmp.eq.s32.totalorder %s28, 3
      %p161 = por %p159, %p160
      %p163 = scmp.ne.s32.totalorder %s146, %s162
      %p164 = scmp.eq.s32.totalorder %s28, 0
      %p165 = por %p163, %p164
      %p166 = scmp.le.s32.totalorder 1, %s22
      %p167 = scmp.lt.s32.totalorder %s22, 5
      %p168 = pnand %p166, %p167
      %p169 = pneg %p168
      // Predicated region
      $region9: #{tpu_custom_call.1} parent=5 // pred_check
        _
      $region10: #{tpu_custom_call.1} parent=5 // pred_check_branch
        %171 = sbr.rel (%p168) target = $region12
      $region11: #{tpu_custom_call.1} parent=5 // pred_region
        %s172 = ssub.s32 %s22, 1
        // Predicated region
        $region13: #{tpu_custom_call.1} parent=11 // pred_check
          %p173 = pneg %p69
        $region14: #{tpu_custom_call.1} parent=11 // pred_check_branch
          %175 = sbr.rel (%p173) target = $region16
        $region15: #{tpu_custom_call.1} parent=11 // pred_region
          _
        $region16: #{tpu_custom_call.1} parent=11 // pred_fallthru
          _
        // Predicated region
        $region17: #{tpu_custom_call.1} parent=11 // pred_check
          %p176 = pneg %p90
        $region18: #{tpu_custom_call.1} parent=11 // pred_check_branch
          %178 = sbr.rel (%p176) target = $region20
        $region19: #{tpu_custom_call.1} parent=11 // pred_region
          _
        $region20: #{tpu_custom_call.1} parent=11 // pred_fallthru
          _
        // Predicated region
        $region21: #{tpu_custom_call.1} parent=11 // pred_check
          %p179 = pneg %p111
        $region22: #{tpu_custom_call.1} parent=11 // pred_check_branch
          %181 = sbr.rel (%p179) target = $region24
        $region23: #{tpu_custom_call.1} parent=11 // pred_region
          _
        $region24: #{tpu_custom_call.1} parent=11 // pred_fallthru
          _
        // Predicated region
        $region25: #{tpu_custom_call.1} parent=11 // pred_check
          %p182 = pneg %p132
        $region26: #{tpu_custom_call.1} parent=11 // pred_check_branch
          %184 = sbr.rel (%p182) target = $region28
        $region27: #{tpu_custom_call.1} parent=11 // pred_region
          _
        $region28: #{tpu_custom_call.1} parent=11 // pred_fallthru
          _
      $region12: #{tpu_custom_call.1} parent=5 // pred_fallthru
        _
      %p185 = scmp.lt.s32.totalorder %s22, 4
      // Predicated region
      $region29: #{tpu_custom_call.1} parent=5 // pred_check
        %p186 = pneg %p185
      $region30: #{tpu_custom_call.1} parent=5 // pred_check_branch
        %188 = sbr.rel (%p186) target = $region32
      $region31: #{tpu_custom_call.1} parent=5 // pred_region
        // Predicated region
        $region33: #{tpu_custom_call.1} parent=31 // pred_check
          %p189 = pneg %p42
        $region34: #{tpu_custom_call.1} parent=31 // pred_check_branch
          %191 = sbr.rel (%p189) target = $region36
        $region35: #{tpu_custom_call.1} parent=31 // pred_region
          %p192 = scmp.lt.s32.totalorder %s22, 3
          %s193 = scalar_select %p192, %s22, 3
          %s194 = smul.addr %s193, 8
          %s195 = scalar_lea.vmem %s1, %s194
        $region36: #{tpu_custom_call.1} parent=31 // pred_fallthru
          _
      $region32: #{tpu_custom_call.1} parent=5 // pred_fallthru
        _
      %p196 = scmp.le.s32.totalorder 1, %s22
      %p197 = scmp.lt.s32.totalorder %s22, 5
      %p198 = pnand %p196, %p197
      %p199 = pneg %p198
      // Predicated region
      $region37: #{tpu_custom_call.1} parent=5 // pred_check
        _
      $region38: #{tpu_custom_call.1} parent=5 // pred_check_branch
        %201 = sbr.rel (%p198) target = $region40
      $region39: #{tpu_custom_call.1} parent=5 // pred_region
        %s202 = ssub.s32 %s22, 1
        %p203 = scmp.lt.s32.totalorder %s27, 3
        %s204 = scalar_select %p203, %s27, 3
        %s205 = smul.addr %s204, 8
        %s206 = scalar_lea.vmem %s1, %s205
        %p207 = pneg %p48
        %p208 = pneg %p45
        %p209 = pneg %p69
        %p210 = pneg %p66
        %p211 = pneg %p90
        %p212 = pneg %p87
        %p213 = pneg %p111
        %p214 = pneg %p108
        %p215 = pneg %p132
        %p216 = pneg %p129
        %p217 = pneg %p158
        %p218 = pneg %p155
        %s219 = sand.u32 %s145, 1
        %s220 = scalar_lea.sflag [#allocation7], %s219
        %s221 = sand.u32 %s145, 1
        %s222 = smul.addr %s221, 8
        %s223 = scalar_lea.vmem [#allocation6], %s222
        %p224 = scmp.lt.s32.totalorder %s27, 3
        %s225 = scalar_select %p224, %s27, 3
        %s226 = smul.addr %s225, 8
        %s227 = scalar_lea.vmem %s1, %s226
        %p228 = scmp.lt.s32.totalorder %s27, 0
        %s229 = ssub.s32 0, %s27
        %s230 = scalar_select %p228, %s229, %s27
        %s231 = sdiv.u32.pop %s230, 3
        %s232 = srem.u32.pop %s230, 3
        %s233 = ssub.s32 0, %s232
        %s234 = scalar_select %p228, %s233, %s232
        %p235 = scmp.eq.s32.totalorder %s27, 0
        // Predicated region
        $region41: #{tpu_custom_call.1} parent=39 // pred_check
          %p236 = pneg %p235
        $region42: #{tpu_custom_call.1} parent=39 // pred_check_branch
          %238 = sbr.rel (%p236) target = $region44
        $region43: #{tpu_custom_call.1} parent=39 // pred_region
          %s239 = sld [smem:[#allocation5]]
          %s240 = smul.addr %s239, 16
          %s241 = scalar_lea.hbm %s6, %s240
          // Predicated region
          $region45: #{tpu_custom_call.1} parent=43 // pred_check
            _
          $region46: #{tpu_custom_call.1} parent=43 // pred_check_branch
            %243 = sbr.rel target = $region48
          $region47: #{tpu_custom_call.1} parent=43 // pred_region
            %244 = sst [smem:[#allocation10]] [#allocation9]
            %245 = sst [smem:[#allocation11]] [#allocation8]
          $region48: #{tpu_custom_call.1} parent=43 // pred_fallthru
            _
          %247 = shalt.err (0)
          %s249 = sshll.u32 [#allocation2], 4
          %s250 = int_to_ptr.vmem [resolvable:$true] %s249
          %252 = dma.hbm_to_vmem [thread:$0]  %s241, 16, %s250, [#allocation3]
          %s253 = sld [smem:[#allocation5 + $0x1]]
          %s254 = smul.addr %s253, 16
          %s255 = scalar_lea.hbm %s6, %s254
          %s256 = scalar_lea.vmem [#allocation2], 1
          // Predicated region
          $region49: #{tpu_custom_call.1} parent=43 // pred_check
            _
          $region50: #{tpu_custom_call.1} parent=43 // pred_check_branch
            %258 = sbr.rel target = $region52
          $region51: #{tpu_custom_call.1} parent=43 // pred_region
            %259 = sst [smem:[#allocation10]] [#allocation13]
            %260 = sst [smem:[#allocation11]] [#allocation12]
          $region52: #{tpu_custom_call.1} parent=43 // pred_fallthru
            _
          %262 = shalt.err (0)
          %s264 = sshll.u32 %s256, 4
          %s265 = int_to_ptr.vmem [resolvable:$true] %s264
          %267 = dma.hbm_to_vmem [thread:$0]  %s255, 16, %s265, [#allocation3]
          %s268 = sld [smem:[#allocation5 + $0x2]]
          %s269 = smul.addr %s268, 16
          %s270 = scalar_lea.hbm %s6, %s269
          %s271 = scalar_lea.vmem [#allocation2], 2
          // Predicated region
          $region53: #{tpu_custom_call.1} parent=43 // pred_check
            _
          $region54: #{tpu_custom_call.1} parent=43 // pred_check_branch
            %273 = sbr.rel target = $region56
          $region55: #{tpu_custom_call.1} parent=43 // pred_region
            %274 = sst [smem:[#allocation10]] [#allocation15]
            %275 = sst [smem:[#allocation11]] [#allocation14]
          $region56: #{tpu_custom_call.1} parent=43 // pred_fallthru
            _
          %277 = shalt.err (0)
          %s279 = sshll.u32 %s271, 4
          %s280 = int_to_ptr.vmem [resolvable:$true] %s279
          %282 = dma.hbm_to_vmem [thread:$0]  %s270, 16, %s280, [#allocation3]
          %s283 = sld [smem:[#allocation5 + $0x3]]
          %s284 = smul.addr %s283, 16
          %s285 = scalar_lea.hbm %s6, %s284
          %s286 = scalar_lea.vmem [#allocation2], 3
          // Predicated region
          $region57: #{tpu_custom_call.1} parent=43 // pred_check
            _
          $region58: #{tpu_custom_call.1} parent=43 // pred_check_branch
            %288 = sbr.rel target = $region60
          $region59: #{tpu_custom_call.1} parent=43 // pred_region
            %289 = sst [smem:[#allocation10]] [#allocation17]
            %290 = sst [smem:[#allocation11]] [#allocation16]
          $region60: #{tpu_custom_call.1} parent=43 // pred_fallthru
            _
          %292 = shalt.err (0)
          %s294 = sshll.u32 %s286, 4
          %s295 = int_to_ptr.vmem [resolvable:$true] %s294
          %297 = dma.hbm_to_vmem [thread:$0]  %s285, 16, %s295, [#allocation3]
          %s298 = sld [smem:[#allocation5 + $0x4]]
          %s299 = smul.addr %s298, 16
          %s300 = scalar_lea.hbm %s6, %s299
          %s301 = scalar_lea.vmem [#allocation2], 4
          // Predicated region
          $region61: #{tpu_custom_call.1} parent=43 // pred_check
            _
          $region62: #{tpu_custom_call.1} parent=43 // pred_check_branch
            %303 = sbr.rel target = $region64
          $region63: #{tpu_custom_call.1} parent=43 // pred_region
            %304 = sst [smem:[#allocation10]] [#allocation19]
            %305 = sst [smem:[#allocation11]] [#allocation18]
          $region64: #{tpu_custom_call.1} parent=43 // pred_fallthru
            _
          %307 = shalt.err (0)
          %s309 = sshll.u32 %s301, 4
          %s310 = int_to_ptr.vmem [resolvable:$true] %s309
          %312 = dma.hbm_to_vmem [thread:$0]  %s300, 16, %s310, [#allocation3]
          %s313 = sld [smem:[#allocation5 + $0x5]]
          %s314 = smul.addr %s313, 16
          %s315 = scalar_lea.hbm %s6, %s314
          %s316 = scalar_lea.vmem [#allocation2], 5
          // Predicated region
          $region65: #{tpu_custom_call.1} parent=43 // pred_check
            _
          $region66: #{tpu_custom_call.1} parent=43 // pred_check_branch
            %318 = sbr.rel target = $region68
          $region67: #{tpu_custom_call.1} parent=43 // pred_region
            %319 = sst [smem:[#allocation10]] [#allocation21]
            %320 = sst [smem:[#allocation11]] [#allocation20]
          $region68: #{tpu_custom_call.1} parent=43 // pred_fallthru
            _
          %322 = shalt.err (0)
          %s324 = sshll.u32 %s316, 4
          %s325 = int_to_ptr.vmem [resolvable:$true] %s324
          %327 = dma.hbm_to_vmem [thread:$0]  %s315, 16, %s325, [#allocation3]
          %s328 = sld [smem:[#allocation5 + $0x6]]
          %s329 = smul.addr %s328, 16
          %s330 = scalar_lea.hbm %s6, %s329
          %s331 = scalar_lea.vmem [#allocation2], 6
          // Predicated region
          $region69: #{tpu_custom_call.1} parent=43 // pred_check
            _
          $region70: #{tpu_custom_call.1} parent=43 // pred_check_branch
            %333 = sbr.rel target = $region72
          $region71: #{tpu_custom_call.1} parent=43 // pred_region
            %334 = sst [smem:[#allocation10]] [#allocation23]
            %335 = sst [smem:[#allocation11]] [#allocation22]
          $region72: #{tpu_custom_call.1} parent=43 // pred_fallthru
            _
          %337 = shalt.err (0)
          %s339 = sshll.u32 %s331, 4
          %s340 = int_to_ptr.vmem [resolvable:$true] %s339
          %342 = dma.hbm_to_vmem [thread:$0]  %s330, 16, %s340, [#allocation3]
          %s343 = sld [smem:[#allocation5 + $0x7]]
          %s344 = smul.addr %s343, 16
          %s345 = scalar_lea.hbm %s6, %s344
          %s346 = scalar_lea.vmem [#allocation2], 7
          // Predicated region
          $region73: #{tpu_custom_call.1} parent=43 // pred_check
            _
          $region74: #{tpu_custom_call.1} parent=43 // pred_check_branch
            %348 = sbr.rel target = $region76
          $region75: #{tpu_custom_call.1} parent=43 // pred_region
            %349 = sst [smem:[#allocation10]] [#allocation25]
            %350 = sst [smem:[#allocation11]] [#allocation24]
          $region76: #{tpu_custom_call.1} parent=43 // pred_fallthru
            _
          %352 = shalt.err (0)
          %s354 = sshll.u32 %s346, 4
          %s355 = int_to_ptr.vmem [resolvable:$true] %s354
          %357 = dma.hbm_to_vmem [thread:$0]  %s345, 16, %s355, [#allocation3]
          %s358 = sld [smem:[#allocation5 + $0x8]]
          %s359 = smul.addr %s358, 16
          %s360 = scalar_lea.hbm %s6, %s359
          %s361 = scalar_lea.vmem [#allocation2], 8
          %s362 = scalar_lea.sflag [#allocation3], 1
          // Predicated region
          $region77: #{tpu_custom_call.1} parent=43 // pred_check
            _
          $region78: #{tpu_custom_call.1} parent=43 // pred_check_branch
            %364 = sbr.rel target = $region80
          $region79: #{tpu_custom_call.1} parent=43 // pred_region
            %365 = sst [smem:[#allocation10]] [#allocation27]
            %366 = sst [smem:[#allocation11]] [#allocation26]
          $region80: #{tpu_custom_call.1} parent=43 // pred_fallthru
            _
          %368 = shalt.err (0)
          %s370 = sshll.u32 %s361, 4
          %s371 = int_to_ptr.vmem [resolvable:$true] %s370
          %373 = dma.hbm_to_vmem [thread:$0]  %s360, 16, %s371, %s362
          %s374 = sld [smem:[#allocation5 + $0x9]]
          %s375 = smul.addr %s374, 16
          %s376 = scalar_lea.hbm %s6, %s375
          %s377 = scalar_lea.vmem [#allocation2], 9
          // Predicated region
          $region81: #{tpu_custom_call.1} parent=43 // pred_check
            _
          $region82: #{tpu_custom_call.1} parent=43 // pred_check_branch
            %379 = sbr.rel target = $region84
          $region83: #{tpu_custom_call.1} parent=43 // pred_region
            %380 = sst [smem:[#allocation10]] [#allocation29]
            %381 = sst [smem:[#allocation11]] [#allocation28]
          $region84: #{tpu_custom_call.1} parent=43 // pred_fallthru
            _
          %383 = shalt.err (0)
          %s385 = sshll.u32 %s377, 4
          %s386 = int_to_ptr.vmem [resolvable:$true] %s385
          %388 = dma.hbm_to_vmem [thread:$0]  %s376, 16, %s386, %s362
          %s389 = sld [smem:[#allocation5 + $0xa]]
          %s390 = smul.addr %s389, 16
          %s391 = scalar_lea.hbm %s6, %s390
          %s392 = scalar_lea.vmem [#allocation2], 10
          // Predicated region
          $region85: #{tpu_custom_call.1} parent=43 // pred_check
            _
          $region86: #{tpu_custom_call.1} parent=43 // pred_check_branch
            %394 = sbr.rel target = $region88
          $region87: #{tpu_custom_call.1} parent=43 // pred_region
            %395 = sst [smem:[#allocation10]] [#allocation31]
            %396 = sst [smem:[#allocation11]] [#allocation30]
          $region88: #{tpu_custom_call.1} parent=43 // pred_fallthru
            _
          %398 = shalt.err (0)
          %s400 = sshll.u32 %s392, 4
          %s401 = int_to_ptr.vmem [resolvable:$true] %s400
          %403 = dma.hbm_to_vmem [thread:$0]  %s391, 16, %s401, %s362
          %s404 = sld [smem:[#allocation5 + $0xb]]
          %s405 = smul.addr %s404, 16
          %s406 = scalar_lea.hbm %s6, %s405
          %s407 = scalar_lea.vmem [#allocation2], 11
          // Predicated region
          $region89: #{tpu_custom_call.1} parent=43 // pred_check
            _
          $region90: #{tpu_custom_call.1} parent=43 // pred_check_branch
            %409 = sbr.rel target = $region92
          $region91: #{tpu_custom_call.1} parent=43 // pred_region
            %410 = sst [smem:[#allocation10]] [#allocation33]
            %411 = sst [smem:[#allocation11]] [#allocation32]
          $region92: #{tpu_custom_call.1} parent=43 // pred_fallthru
            _
          %413 = shalt.err (0)
          %s415 = sshll.u32 %s407, 4
          %s416 = int_to_ptr.vmem [resolvable:$true] %s415
          %418 = dma.hbm_to_vmem [thread:$0]  %s406, 16, %s416, %s362
          %s419 = sld [smem:[#allocation5 + $0xc]]
          %s420 = smul.addr %s419, 16
          %s421 = scalar_lea.hbm %s6, %s420
          %s422 = scalar_lea.vmem [#allocation2], 12
          // Predicated region
          $region93: #{tpu_custom_call.1} parent=43 // pred_check
            _
          $region94: #{tpu_custom_call.1} parent=43 // pred_check_branch
            %424 = sbr.rel target = $region96
          $region95: #{tpu_custom_call.1} parent=43 // pred_region
            %425 = sst [smem:[#allocation10]] [#allocation35]
            %426 = sst [smem:[#allocation11]] [#allocation34]
          $region96: #{tpu_custom_call.1} parent=43 // pred_fallthru
            _
          %428 = shalt.err (0)
          %s430 = sshll.u32 %s422, 4
          %s431 = int_to_ptr.vmem [resolvable:$true] %s430
          %433 = dma.hbm_to_vmem [thread:$0]  %s421, 16, %s431, %s362
          %s434 = sld [smem:[#allocation5 + $0xd]]
          %s435 = smul.addr %s434, 16
          %s436 = scalar_lea.hbm %s6, %s435
          %s437 = scalar_lea.vmem [#allocation2], 13
          // Predicated region
          $region97: #{tpu_custom_call.1} parent=43 // pred_check
            _
          $region98: #{tpu_custom_call.1} parent=43 // pred_check_branch
            %439 = sbr.rel target = $region100
          $region99: #{tpu_custom_call.1} parent=43 // pred_region
            %440 = sst [smem:[#allocation10]] [#allocation37]
            %441 = sst [smem:[#allocation11]] [#allocation36]
          $region100: #{tpu_custom_call.1} parent=43 // pred_fallthru
            _
          %443 = shalt.err (0)
          %s445 = sshll.u32 %s437, 4
          %s446 = int_to_ptr.vmem [resolvable:$true] %s445
          %448 = dma.hbm_to_vmem [thread:$0]  %s436, 16, %s446, %s362
          %s449 = sld [smem:[#allocation5 + $0xe]]
          %s450 = smul.addr %s449, 16
          %s451 = scalar_lea.hbm %s6, %s450
          %s452 = scalar_lea.vmem [#allocation2], 14
          // Predicated region
          $region101: #{tpu_custom_call.1} parent=43 // pred_check
            _
          $region102: #{tpu_custom_call.1} parent=43 // pred_check_branch
            %454 = sbr.rel target = $region104
          $region103: #{tpu_custom_call.1} parent=43 // pred_region
            %455 = sst [smem:[#allocation10]] [#allocation39]
            %456 = sst [smem:[#allocation11]] [#allocation38]
          $region104: #{tpu_custom_call.1} parent=43 // pred_fallthru
            _
          %458 = shalt.err (0)
          %s460 = sshll.u32 %s452, 4
          %s461 = int_to_ptr.vmem [resolvable:$true] %s460
          %463 = dma.hbm_to_vmem [thread:$0]  %s451, 16, %s461, %s362
          %s464 = sld [smem:[#allocation5 + $0xf]]
          %s465 = smul.addr %s464, 16
          %s466 = scalar_lea.hbm %s6, %s465
          %s467 = scalar_lea.vmem [#allocation2], 15
          // Predicated region
          $region105: #{tpu_custom_call.1} parent=43 // pred_check
            _
          $region106: #{tpu_custom_call.1} parent=43 // pred_check_branch
            %469 = sbr.rel target = $region108
          $region107: #{tpu_custom_call.1} parent=43 // pred_region
            %470 = sst [smem:[#allocation10]] [#allocation41]
            %471 = sst [smem:[#allocation11]] [#allocation40]
          $region108: #{tpu_custom_call.1} parent=43 // pred_fallthru
            _
          %473 = shalt.err (0)
          %s475 = sshll.u32 %s467, 4
          %s476 = int_to_ptr.vmem [resolvable:$true] %s475
          %478 = dma.hbm_to_vmem [thread:$0]  %s466, 16, %s476, %s362
        $region44: #{tpu_custom_call.1} parent=39 // pred_fallthru
          _
        %s479 = sadd.s32 %s27, 2
        %p480 = scmp.lt.s32.totalorder %s479, 4
        // Predicated region
        $region109: #{tpu_custom_call.1} parent=39 // pred_check
          %p481 = pneg %p480
        $region110: #{tpu_custom_call.1} parent=39 // pred_check_branch
          %483 = sbr.rel (%p481) target = $region112
        $region111: #{tpu_custom_call.1} parent=39 // pred_region
          %p484 = scmp.lt.s32.totalorder %s479, 0
          %s485 = ssub.s32 0, %s479
          %s486 = scalar_select %p484, %s485, %s479
          %s487 = sdiv.u32.pop %s486, 3
          %s488 = srem.u32.pop %s486, 3
          %s489 = ssub.s32 0, %s488
          %s490 = scalar_select %p484, %s489, %s488
          %s491 = smul.u32 %s479, 8
          %s492 = sld [smem:[#allocation5 + %s491]]
          %s493 = smul.addr %s492, 16
          %s494 = scalar_lea.hbm %s6, %s493
          %s495 = smul.u32 %s490, 8
          %s496 = scalar_lea.vmem [#allocation2], %s495
          %s497 = scalar_lea.sflag [#allocation3], %s490
          // Predicated region
          $region113: #{tpu_custom_call.1} parent=111 // pred_check
            _
          $region114: #{tpu_custom_call.1} parent=111 // pred_check_branch
            %499 = sbr.rel target = $region116
          $region115: #{tpu_custom_call.1} parent=111 // pred_region
            %500 = sst [smem:[#allocation10]] [#allocation43]
            %501 = sst [smem:[#allocation11]] [#allocation42]
          $region116: #{tpu_custom_call.1} parent=111 // pred_fallthru
            _
          %503 = shalt.err (0)
          %s505 = sshll.u32 %s496, 4
          %s506 = int_to_ptr.vmem [resolvable:$true] %s505
          %508 = dma.hbm_to_vmem [thread:$0]  %s494, 16, %s506, %s497
          %s509 = sadd.s32 %s491, 1
          %s510 = sld [smem:[#allocation5 + %s509]]
          %s511 = smul.addr %s510, 16
          %s512 = scalar_lea.hbm %s6, %s511
          %s513 = sadd.s32 1, %s495
          %s514 = scalar_lea.vmem [#allocation2], %s513
          // Predicated region
          $region117: #{tpu_custom_call.1} parent=111 // pred_check
            _
          $region118: #{tpu_custom_call.1} parent=111 // pred_check_branch
            %516 = sbr.rel target = $region120
          $region119: #{tpu_custom_call.1} parent=111 // pred_region
            %517 = sst [smem:[#allocation10]] [#allocation45]
            %518 = sst [smem:[#allocation11]] [#allocation44]
          $region120: #{tpu_custom_call.1} parent=111 // pred_fallthru
            _
          %520 = shalt.err (0)
          %s522 = sshll.u32 %s514, 4
          %s523 = int_to_ptr.vmem [resolvable:$true] %s522
          %525 = dma.hbm_to_vmem [thread:$0]  %s512, 16, %s523, %s497
          %s526 = sadd.s32 %s491, 2
          %s527 = sld [smem:[#allocation5 + %s526]]
          %s528 = smul.addr %s527, 16
          %s529 = scalar_lea.hbm %s6, %s528
          %s530 = sadd.s32 2, %s495
          %s531 = scalar_lea.vmem [#allocation2], %s530
          // Predicated region
          $region121: #{tpu_custom_call.1} parent=111 // pred_check
            _
          $region122: #{tpu_custom_call.1} parent=111 // pred_check_branch
            %533 = sbr.rel target = $region124
          $region123: #{tpu_custom_call.1} parent=111 // pred_region
            %534 = sst [smem:[#allocation10]] [#allocation47]
            %535 = sst [smem:[#allocation11]] [#allocation46]
          $region124: #{tpu_custom_call.1} parent=111 // pred_fallthru
            _
          %537 = shalt.err (0)
          %s539 = sshll.u32 %s531, 4
          %s540 = int_to_ptr.vmem [resolvable:$true] %s539
          %542 = dma.hbm_to_vmem [thread:$0]  %s529, 16, %s540, %s497
          %s543 = sadd.s32 %s491, 3
          %s544 = sld [smem:[#allocation5 + %s543]]
          %s545 = smul.addr %s544, 16
          %s546 = scalar_lea.hbm %s6, %s545
          %s547 = sadd.s32 3, %s495
          %s548 = scalar_lea.vmem [#allocation2], %s547
          // Predicated region
          $region125: #{tpu_custom_call.1} parent=111 // pred_check
            _
          $region126: #{tpu_custom_call.1} parent=111 // pred_check_branch
            %550 = sbr.rel target = $region128
          $region127: #{tpu_custom_call.1} parent=111 // pred_region
            %551 = sst [smem:[#allocation10]] [#allocation49]
            %552 = sst [smem:[#allocation11]] [#allocation48]
          $region128: #{tpu_custom_call.1} parent=111 // pred_fallthru
            _
          %554 = shalt.err (0)
          %s556 = sshll.u32 %s548, 4
          %s557 = int_to_ptr.vmem [resolvable:$true] %s556
          %559 = dma.hbm_to_vmem [thread:$0]  %s546, 16, %s557, %s497
          %s560 = sadd.s32 %s491, 4
          %s561 = sld [smem:[#allocation5 + %s560]]
          %s562 = smul.addr %s561, 16
          %s563 = scalar_lea.hbm %s6, %s562
          %s564 = sadd.s32 4, %s495
          %s565 = scalar_lea.vmem [#allocation2], %s564
          // Predicated region
          $region129: #{tpu_custom_call.1} parent=111 // pred_check
            _
          $region130: #{tpu_custom_call.1} parent=111 // pred_check_branch
            %567 = sbr.rel target = $region132
          $region131: #{tpu_custom_call.1} parent=111 // pred_region
            %568 = sst [smem:[#allocation10]] [#allocation51]
            %569 = sst [smem:[#allocation11]] [#allocation50]
          $region132: #{tpu_custom_call.1} parent=111 // pred_fallthru
            _
          %571 = shalt.err (0)
          %s573 = sshll.u32 %s565, 4
          %s574 = int_to_ptr.vmem [resolvable:$true] %s573
          %576 = dma.hbm_to_vmem [thread:$0]  %s563, 16, %s574, %s497
          %s577 = sadd.s32 %s491, 5
          %s578 = sld [smem:[#allocation5 + %s577]]
          %s579 = smul.addr %s578, 16
          %s580 = scalar_lea.hbm %s6, %s579
          %s581 = sadd.s32 5, %s495
          %s582 = scalar_lea.vmem [#allocation2], %s581
          // Predicated region
          $region133: #{tpu_custom_call.1} parent=111 // pred_check
            _
          $region134: #{tpu_custom_call.1} parent=111 // pred_check_branch
            %584 = sbr.rel target = $region136
          $region135: #{tpu_custom_call.1} parent=111 // pred_region
            %585 = sst [smem:[#allocation10]] [#allocation53]
            %586 = sst [smem:[#allocation11]] [#allocation52]
          $region136: #{tpu_custom_call.1} parent=111 // pred_fallthru
            _
          %588 = shalt.err (0)
          %s590 = sshll.u32 %s582, 4
          %s591 = int_to_ptr.vmem [resolvable:$true] %s590
          %593 = dma.hbm_to_vmem [thread:$0]  %s580, 16, %s591, %s497
          %s594 = sadd.s32 %s491, 6
          %s595 = sld [smem:[#allocation5 + %s594]]
          %s596 = smul.addr %s595, 16
          %s597 = scalar_lea.hbm %s6, %s596
          %s598 = sadd.s32 6, %s495
          %s599 = scalar_lea.vmem [#allocation2], %s598
          // Predicated region
          $region137: #{tpu_custom_call.1} parent=111 // pred_check
            _
          $region138: #{tpu_custom_call.1} parent=111 // pred_check_branch
            %601 = sbr.rel target = $region140
          $region139: #{tpu_custom_call.1} parent=111 // pred_region
            %602 = sst [smem:[#allocation10]] [#allocation55]
            %603 = sst [smem:[#allocation11]] [#allocation54]
          $region140: #{tpu_custom_call.1} parent=111 // pred_fallthru
            _
          %605 = shalt.err (0)
          %s607 = sshll.u32 %s599, 4
          %s608 = int_to_ptr.vmem [resolvable:$true] %s607
          %610 = dma.hbm_to_vmem [thread:$0]  %s597, 16, %s608, %s497
          %s611 = sadd.s32 %s491, 7
          %s612 = sld [smem:[#allocation5 + %s611]]
          %s613 = smul.addr %s612, 16
          %s614 = scalar_lea.hbm %s6, %s613
          %s615 = sadd.s32 7, %s495
          %s616 = scalar_lea.vmem [#allocation2], %s615
          // Predicated region
          $region141: #{tpu_custom_call.1} parent=111 // pred_check
            _
          $region142: #{tpu_custom_call.1} parent=111 // pred_check_branch
            %618 = sbr.rel target = $region144
          $region143: #{tpu_custom_call.1} parent=111 // pred_region
            %619 = sst [smem:[#allocation10]] [#allocation57]
            %620 = sst [smem:[#allocation11]] [#allocation56]
          $region144: #{tpu_custom_call.1} parent=111 // pred_fallthru
            _
          %622 = shalt.err (0)
          %s624 = sshll.u32 %s616, 4
          %s625 = int_to_ptr.vmem [resolvable:$true] %s624
          %627 = dma.hbm_to_vmem [thread:$0]  %s614, 16, %s625, %s497
        $region112: #{tpu_custom_call.1} parent=39 // pred_fallthru
          _
        %s628 = smul.u32 %s234, 8
        %s629 = scalar_lea.vmem [#allocation2], %s628
        %s630 = scalar_lea.sflag [#allocation3], %s234
        %s631 = smul.u32 8, 1
        %s632 = sshll.u32 %s631, 4
        %633 = dma.done %s630, %s632
        %p634 = scmp.lt.s32.totalorder %s27, 0
        %s635 = ssub.s32 0, %s27
        %s636 = scalar_select %p634, %s635, %s27
        %s637 = sand.u32 %s636, 1
        %s638 = ssub.s32 0, %s637
        %s639 = scalar_select %p634, %s638, %s637
        %s640 = smul.u32 %s639, 8
        %v641 = vld [vmem:[%s629] sm:$0xff]
        %s642 = scalar_lea.vmem %s2, %s640
        %v643 = vld [vmem:[%s642] sm:$0xff]
        %v644 = vadd.f32 %v641, %v643
        %v645 = vld [vmem:[%s3] sm:$0x3]
        %v647 = vrot.slane %v645, 7
        %v649 = vsub.f32 %v645, %v647
        %v650 = vlaneseq
        %v651 = vshrl.u32 %v650, 7
        %v652 = vsub.s32 0, %v651
        %v653 = vrot.slane %v645, %v652
        %v654 = vadd.f32 %v644, %v653
        %v655 = vld [vmem:[%s227] sm:$0xff]
        %v656 = vcvt.s32.f32 %v655
        %658 = vset.pattern.permute.xlu0 0
        %659 = vperm.xlu0 %658, %v656
        %v660 = vpop.permute.xlu0 %659
        %v662 = vlaneseq
        %v663 = vshrl.u32 %v662, 7
        %v664 = vsub.s32 1, %v663
        %v665 = vrot.slane %v649, %v664
        %v666 = vmul.f32 %v660, %v665
        %v667 = vadd.f32 %v654, %v666
        %668 = vadd.xlane.f32.xlu0 %v667
        %v669 = vpop.xlane.xlu0 %668
        %v670 = vrcp.pop 128.0
        %v671 = vmul.f32 %v669, %v670
        %v672 = vmul.f32 %v667, %v667
        %673 = vadd.xlane.f32.xlu0 %v672
        %v674 = vpop.xlane.xlu0 %673
        %v675 = vmul.f32 %v674, %v670
        %v676 = vmul.f32 %v671, %v671
        %v677 = vsub.f32 %v675, %v676
        %v678 = vadd.f32 %v677, 1e-12
        %v679 = vrsqrt.pop %v678
        %v680 = vsub.f32 %v667, %v671
        %v681 = vld [vmem:[%s4] sm:$0x1]
        %v683 = vlaneseq
        %v684 = vshrl.u32 %v683, 7
        %v685 = vsub.s32 0, %v684
        %v686 = vrot.slane %v681, %v685
        %v688 = vmul.f32 %v679, %v686
        %v689 = vmul.f32 %v680, %v688
        %v690 = vld [vmem:[%s5] sm:$0x1]
        %v692 = vlaneseq
        %v693 = vshrl.u32 %v692, 7
        %v694 = vsub.s32 0, %v693
        %v695 = vrot.slane %v690, %v694
        %v697 = vadd.f32 %v689, %v695
        %698 = vst [vmem:[%s223] sm:$0xff] %v697
        %s699 = sand.u32 %s145, 1
        %s700 = scalar_lea.sflag [#allocation7], %s699
        %s701 = sand.u32 %s145, 1
        %s702 = smul.addr %s701, 8
        %s703 = scalar_lea.vmem [#allocation6], %s702
        // Predicated region
        $region145: #{tpu_custom_call.1} parent=39 // pred_check
          %p704 = pneg %p155
        $region146: #{tpu_custom_call.1} parent=39 // pred_check_branch
          %706 = sbr.rel (%p704) target = $region148
        $region147: #{tpu_custom_call.1} parent=39 // pred_region
          %s708 = ssub.s32 128, 128
          %709 = vsyncadd %s700, %s708
          %s710 = smul.addr %s27, 128
          %s711 = scalar_lea.hbm %s7, %s710
          %s713 = sshll.u32 %s703, 4
          %s714 = int_to_ptr.vmem [resolvable:$true] %s713
          %716 = dma.vmem_to_hbm [thread:$0]  %s714, 128, %s711, %s700
        $region148: #{tpu_custom_call.1} parent=39 // pred_fallthru
          _
      $region40: #{tpu_custom_call.1} parent=5 // pred_fallthru
        _
      %p717 = scmp.le.s32.totalorder 2, %s22
      // Predicated region
      $region149: #{tpu_custom_call.1} parent=5 // pred_check
        %p718 = pneg %p717
      $region150: #{tpu_custom_call.1} parent=5 // pred_check_branch
        %720 = sbr.rel (%p718) target = $region152
      $region151: #{tpu_custom_call.1} parent=5 // pred_region
        %s721 = ssub.s32 %s22, 2
        // Predicated region
        $region153: #{tpu_custom_call.1} parent=151 // pred_check
          %p722 = pneg %p161
        $region154: #{tpu_custom_call.1} parent=151 // pred_check_branch
          %724 = sbr.rel (%p722) target = $region156
        $region155: #{tpu_custom_call.1} parent=151 // pred_region
          %s725 = sand.u32 %s146, 1
          %s726 = scalar_lea.sflag [#allocation7], %s725
          %s727 = sand.u32 %s146, 1
          %s728 = smul.addr %s727, 8
          %s729 = scalar_lea.vmem [#allocation6], %s728
          %730 = dma.done %s726, 128
        $region156: #{tpu_custom_call.1} parent=151 // pred_fallthru
          _
      $region152: #{tpu_custom_call.1} parent=5 // pred_fallthru
        _
    $region6: #{tpu_custom_call.1} parent=1 // loop_footer
      %s26 = sadd.s32 1, %s22
    $region7: #{tpu_custom_call.1} parent=1 // loop_footer_branch
      %21 = sbr.rel target = $region3
    $region8: #{tpu_custom_call.1} parent=1 // loop_exit
      _
    %731 = vsyncpa [#allocation7], 1
    %s732 = scalar_lea.sflag [#allocation7], 1
    %733 = vsyncpa %s732, 1
  %734 = vsyncmov [#allocation3]
  %s735 = vpop.sfrf %734
  %p736 = scmp.eq.s32.totalorder %s735, 0
  %p737 = pneg %p736
  %739 = shalt.err (%p737)
  %s740 = scalar_lea.sflag [#allocation3], 1
  %741 = vsyncmov %s740
  %s742 = vpop.sfrf %741
  %p743 = scmp.eq.s32.totalorder %s742, 0
  %p744 = pneg %p743
  %746 = shalt.err (%p744)
  %s747 = scalar_lea.sflag [#allocation3], 2
  %748 = vsyncmov %s747
  %s749 = vpop.sfrf %748
  %p750 = scmp.eq.s32.totalorder %s749, 0
  %p751 = pneg %p750
  %753 = shalt.err (%p751)

</llo_original>
